<compile_context>
chip_gen: v5e
topology: v5e:2x2
jax: 0.10.0
libtpu: 0.0.40
codegen_flags: <defaults>
</compile_context>

<pallas_src>
import math

import numpy as np
import jax
import jax.numpy as jnp
from jax.experimental import pallas as pl
from jax.experimental.pallas import tpu as pltpu


# ----------------------------- Pallas kernel ------------------------------- #

def _fused_actor_critic_kernel(
        x_ref, m1_ref, b1_ref, m2_ref, b2_ref, m3_ref, b3_ref,
        pw1_ref, pb1_ref, pw2_ref, pb2_ref,
        vw1_ref, vb1_ref, vw2_ref, vb2_ref,
        aw_ref, ab_ref, logstd_ref, noise_ref,
        out_ref):
    """Whole ActorCritic forward on one batch tile; everything VMEM-resident."""
    f32 = jnp.float32

    def dense(h, w_ref, b_ref, relu):
        y = jnp.dot(h, w_ref[...], preferred_element_type=f32) + b_ref[...]
        return jnp.maximum(y, 0.0) if relu else y

    x = x_ref[...]

    # CNN: each Conv2d(k=3, s=2)+ReLU is one dense matmul over the
    # NCHW-flattened activation (dense conv matrices built at prepare time).
    a = dense(x, m1_ref, b1_ref, relu=True)
    a = dense(a, m2_ref, b2_ref, relu=True)
    feat = dense(a, m3_ref, b3_ref, relu=True)          # == nn.Flatten output

    # policy_net -> latent_pi ; value_net -> values ; action_net -> mean
    h_pi = dense(feat, pw1_ref, pb1_ref, relu=True)
    latent_pi = dense(h_pi, pw2_ref, pb2_ref, relu=False)
    h_v = dense(feat, vw1_ref, vb1_ref, relu=True)
    values = dense(h_v, vw2_ref, vb2_ref, relu=False)
    mean = dense(latent_pi, aw_ref, ab_ref, relu=False)

    # DiagGaussianDistribution: sample + log_prob.
    # actions = mean + noise * std  =>  z == noise exactly (no re-derivation).
    log_std = logstd_ref[...]
    noise = noise_ref[...]
    actions = mean + noise * jnp.exp(log_std)
    act_dim = noise.shape[-1]
    logp = (jnp.sum(-0.5 * noise * noise - log_std, axis=-1, keepdims=True)
            - 0.5 * act_dim * math.log(2.0 * math.pi))

    # Lane-dense packed output: [actions | values | log_prob | zero pad].
    out_ref[...] = jnp.zeros_like(out_ref)
    out_ref[:, 0:act_dim] = actions
    out_ref[:, act_dim:act_dim + 1] = values
    out_ref[:, act_dim + 1:act_dim + 2] = logp


# ------------------------------- JAX wrapper -------------------------------- #

def _round_up(x, m):
    return ((x + m - 1) // m) * m


def actor_critic_forward(obs, prepared, noise):
    """Fused forward. Returns (actions, values, log_prob) like ActorCritic.forward."""
    B = obs.shape[0]
    A = noise.shape[-1]
    x = obs.reshape(B, -1).astype(jnp.float32)   # == view(-1,1,w,h) then NCHW flatten
    noise = noise.astype(jnp.float32)

    # Batch tiling: one full block for small B; 256-row parallel tiles for large
    # B (v7x megacore sharding + VMEM safety).  Pad B to a tile multiple.
    if B <= 256:
        tb, bp = B, B
    else:
        tb = 256
        bp = _round_up(B, tb)
    if bp != B:
        x = jnp.pad(x, ((0, bp - B), (0, 0)))
        noise = jnp.pad(noise, ((0, bp - B), (0, 0)))

    out_w = max(128, _round_up(A + 2, 128))      # lane-dense packed output width

    weights = (prepared["m1"], prepared["c1b"], prepared["m2"], prepared["c2b"],
               prepared["m3"], prepared["c3b"],
               prepared["pw1"], prepared["pb1"], prepared["pw2"], prepared["pb2"],
               prepared["vw1"], prepared["vb1"], prepared["vw2"], prepared["vb2"],
               prepared["aw"], prepared["ab"], prepared["log_std"])

    def batch_spec(ncols):
        return pl.BlockSpec((tb, ncols), lambda i: (i, 0))

    weight_specs = [pl.BlockSpec(w.shape, lambda i: (0, 0)) for w in weights]

    packed = pl.pallas_call(
        _fused_actor_critic_kernel,
        out_shape=jax.ShapeDtypeStruct((bp, out_w), jnp.float32),
        grid=(bp // tb,),
        in_specs=[batch_spec(x.shape[1])] + weight_specs + [batch_spec(A)],
        out_specs=batch_spec(out_w),
        compiler_params=pltpu.CompilerParams(
            dimension_semantics=("parallel",),
            vmem_limit_bytes=32 * 1024 * 1024),
    )(x, *weights, noise)

    actions = packed[:B, :A]
    values = packed[:B, A:A + 1]
    log_prob = packed[:B, A + 1]
    return actions, values, log_prob


# -------------------- one-time weight preparation (no jit) ------------------ #

def _conv_to_dense(w_oihw, b, h_in, w_in, stride=2):
    """Lower Conv2d(kernel=3, stride=2) to a dense matmul over NCHW-flattened
    activations:  y_flat = x_flat @ M + b_flat, flatten order (C, H, W)."""
    w = np.asarray(w_oihw, dtype=np.float32)
    b = np.asarray(b, dtype=np.float32)
    cout, cin, kh_sz, kw_sz = w.shape
    h_out = (h_in - kh_sz) // stride + 1
    w_out = (w_in - kw_sz) // stride + 1
    m = np.zeros((cin, h_in, w_in, cout, h_out, w_out), np.float32)
    for kh in range(kh_sz):
        for kw in range(kw_sz):
            wt = np.transpose(w[:, :, kh, kw])          # (cin, cout)
            for oh in range(h_out):
                for ow in range(w_out):
                    m[:, stride * oh + kh, stride * ow + kw, :, oh, ow] = wt
    m = m.reshape(cin * h_in * w_in, cout * h_out * w_out)
    b_flat = np.repeat(b, h_out * w_out)[None, :]
    return m, b_flat, (h_out, w_out)


def prepare_params(params, h, w):
    """One-time weight repack (outside the jitted forward): convs -> dense matmuls."""
    m1, b1, (h1, w1) = _conv_to_dense(params["cw1"], params["cb1"], h, w)
    m2, b2, (h2, w2) = _conv_to_dense(params["cw2"], params["cb2"], h1, w1)
    m3, b3, _ = _conv_to_dense(params["cw3"], params["cb3"], h2, w2)
    return dict(
        m1=jnp.asarray(m1), c1b=jnp.asarray(b1),
        m2=jnp.asarray(m2), c2b=jnp.asarray(b2),
        m3=jnp.asarray(m3), c3b=jnp.asarray(b3),
        pw1=params["pw1"], pb1=params["pb1"], pw2=params["pw2"], pb2=params["pb2"],
        vw1=params["vw1"], vb1=params["vb1"], vw2=params["vw2"], vb2=params["vb2"],
        aw=params["aw"], ab=params["ab"], log_std=params["log_std"],
    )


# ----------------------------- params / reference --------------------------- #

def init_params(key, H, W, action_dim, out_dim=64):
    def conv_out(s):
        return (s - 3) // 2 + 1

    h3 = conv_out(conv_out(conv_out(H)))
    w3 = conv_out(conv_out(conv_out(W)))
    n_flatten = 16 * h3 * w3

    ks = jax.random.split(key, 12)

    def rnd(k, shape, scale=0.1):
        return (scale * jax.random.normal(k, shape)).astype(jnp.float32)

    params = dict(
        # cnn: Conv2d(1,16,3,2) / Conv2d(16,16,3,2) / Conv2d(16,16,3,2) (PyTorch OIHW)
        cw1=rnd(ks[0], (16, 1, 3, 3)),  cb1=rnd(ks[1], (16,)),
        cw2=rnd(ks[2], (16, 16, 3, 3)), cb2=rnd(ks[3], (16,)),
        cw3=rnd(ks[4], (16, 16, 3, 3)), cb3=rnd(ks[5], (16,)),
        # policy_net: Linear(n_flatten,64) ReLU Linear(64,out_dim=64)
        pw1=rnd(ks[6], (n_flatten, 64)), pb1=jnp.zeros((1, 64), jnp.float32),
        pw2=rnd(ks[7], (64, out_dim)),   pb2=jnp.zeros((1, out_dim), jnp.float32),
        # value_net: Linear(n_flatten,64) ReLU Linear(64,1)
        vw1=rnd(ks[8], (n_flatten, 64)), vb1=jnp.zeros((1, 64), jnp.float32),
        vw2=rnd(ks[9], (64, 1)),         vb2=jnp.zeros((1, 1), jnp.float32),
        # action_net: Linear(64, action_dim); log_std init 0.0
        aw=rnd(ks[10], (out_dim, action_dim)), ab=jnp.zeros((1, action_dim), jnp.float32),
        log_std=jnp.zeros((1, action_dim), jnp.float32),
    )
    return params, n_flatten


def reference_forward(obs, params, noise):
    """Pure-JAX reference of the same forward pass (for correctness check)."""
    B, H, W = obs.shape
    x = obs.reshape(B, 1, H, W)

    def conv(x, w, b):
        y = jax.lax.conv_general_dilated(
            x, w, (2, 2), "VALID", dimension_numbers=("NCHW", "OIHW", "NCHW"))
        return jnp.maximum(y + b[None, :, None, None], 0.0)

    x = conv(x, params["cw1"], params["cb1"])
    x = conv(x, params["cw2"], params["cb2"])
    x = conv(x, params["cw3"], params["cb3"])
    f = x.reshape(B, -1)

    h = jnp.maximum(f @ params["pw1"] + params["pb1"], 0.0)
    latent_pi = h @ params["pw2"] + params["pb2"]
    hv = jnp.maximum(f @ params["vw1"] + params["vb1"], 0.0)
    values = hv @ params["vw2"] + params["vb2"]
    mean = latent_pi @ params["aw"] + params["ab"]
    std = jnp.exp(params["log_std"])
    actions = mean + noise * std
    z = (actions - mean) / std
    logp = jnp.sum(-0.5 * z * z - params["log_std"] - 0.5 * jnp.log(2.0 * jnp.pi), axis=-1)
    return actions, values, logp


if __name__ == "__main__":
    key = jax.random.PRNGKey(0)
    B, H, W = 2, 16, 16        # observation_space: 16x16 image
    A = 2                      # action_space.shape[0] = 2 (evaluate_actions uses view(-1,2))

    k_obs, k_param, k_noise = jax.random.split(key, 3)
    params, n_flatten = init_params(k_param, H, W, A)
    prepared = prepare_params(params, H, W)

    obs = jax.random.normal(k_obs, (B, H, W), dtype=jnp.float32)
    noise = jax.random.normal(k_noise, (B, A), dtype=jnp.float32)   # dist.sample() eps

    fwd = jax.jit(actor_critic_forward)
    actions, values, log_prob = fwd(obs, prepared, noise)
    jax.block_until_ready((actions, values, log_prob))

    ref_a, ref_v, ref_lp = reference_forward(obs, params, noise)
    assert actions.shape == (B, A) and values.shape == (B, 1) and log_prob.shape == (B,)
    assert jnp.allclose(actions, ref_a, rtol=1e-4, atol=1e-4)
    assert jnp.allclose(values, ref_v, rtol=1e-4, atol=1e-4)
    assert jnp.allclose(log_prob, ref_lp, rtol=1e-4, atol=1e-4)

    print("KERNEL_OK")
</pallas_src>

<mosaic_0001>
module attributes {stable_mosaic.version = 11 : i64} {
  func.func @_fused_actor_critic_kernel(%arg0: i32, %arg1: memref<2x256xf32, #tpu.memory_space<vmem>>, %arg2: memref<256x784xf32, #tpu.memory_space<vmem>>, %arg3: memref<1x784xf32, #tpu.memory_space<vmem>>, %arg4: memref<784x144xf32, #tpu.memory_space<vmem>>, %arg5: memref<1x144xf32, #tpu.memory_space<vmem>>, %arg6: memref<144x16xf32, #tpu.memory_space<vmem>>, %arg7: memref<1x16xf32, #tpu.memory_space<vmem>>, %arg8: memref<16x64xf32, #tpu.memory_space<vmem>>, %arg9: memref<1x64xf32, #tpu.memory_space<vmem>>, %arg10: memref<64x64xf32, #tpu.memory_space<vmem>>, %arg11: memref<1x64xf32, #tpu.memory_space<vmem>>, %arg12: memref<16x64xf32, #tpu.memory_space<vmem>>, %arg13: memref<1x64xf32, #tpu.memory_space<vmem>>, %arg14: memref<64x1xf32, #tpu.memory_space<vmem>>, %arg15: memref<1x1xf32, #tpu.memory_space<vmem>>, %arg16: memref<64x2xf32, #tpu.memory_space<vmem>>, %arg17: memref<1x2xf32, #tpu.memory_space<vmem>>, %arg18: memref<1x2xf32, #tpu.memory_space<vmem>>, %arg19: memref<2x2xf32, #tpu.memory_space<vmem>>, %arg20: memref<2x128xf32, #tpu.memory_space<vmem>>) attributes {dimension_semantics = [#tpu.dimension_semantics<parallel>], iteration_bounds = array<i64: 1>, scalar_prefetch = 0 : i64, scratch_operands = 0 : i64, tpu.core_type = #tpu.core_type<tc>, window_params = [{transform_indices = @transform_0, window_bounds = array<i64: 2, 256>}, {pipeline_mode = #tpu.pipeline_mode<synchronous>, transform_indices = @transform_1, window_bounds = array<i64: 256, 784>}, {pipeline_mode = #tpu.pipeline_mode<synchronous>, transform_indices = @transform_2, window_bounds = array<i64: 1, 784>}, {pipeline_mode = #tpu.pipeline_mode<synchronous>, transform_indices = @transform_3, window_bounds = array<i64: 784, 144>}, {pipeline_mode = #tpu.pipeline_mode<synchronous>, transform_indices = @transform_4, window_bounds = array<i64: 1, 144>}, {pipeline_mode = #tpu.pipeline_mode<synchronous>, transform_indices = @transform_5, window_bounds = array<i64: 144, 16>}, {pipeline_mode = #tpu.pipeline_mode<synchronous>, transform_indices = @transform_6, window_bounds = array<i64: 1, 16>}, {pipeline_mode = #tpu.pipeline_mode<synchronous>, transform_indices = @transform_7, window_bounds = array<i64: 16, 64>}, {pipeline_mode = #tpu.pipeline_mode<synchronous>, transform_indices = @transform_8, window_bounds = array<i64: 1, 64>}, {pipeline_mode = #tpu.pipeline_mode<synchronous>, transform_indices = @transform_9, window_bounds = array<i64: 64, 64>}, {pipeline_mode = #tpu.pipeline_mode<synchronous>, transform_indices = @transform_10, window_bounds = array<i64: 1, 64>}, {pipeline_mode = #tpu.pipeline_mode<synchronous>, transform_indices = @transform_11, window_bounds = array<i64: 16, 64>}, {pipeline_mode = #tpu.pipeline_mode<synchronous>, transform_indices = @transform_12, window_bounds = array<i64: 1, 64>}, {pipeline_mode = #tpu.pipeline_mode<synchronous>, transform_indices = @transform_13, window_bounds = array<i64: 64, 1>}, {pipeline_mode = #tpu.pipeline_mode<synchronous>, transform_indices = @transform_14, window_bounds = array<i64: 1, 1>}, {pipeline_mode = #tpu.pipeline_mode<synchronous>, transform_indices = @transform_15, window_bounds = array<i64: 64, 2>}, {pipeline_mode = #tpu.pipeline_mode<synchronous>, transform_indices = @transform_16, window_bounds = array<i64: 1, 2>}, {pipeline_mode = #tpu.pipeline_mode<synchronous>, transform_indices = @transform_17, window_bounds = array<i64: 1, 2>}, {transform_indices = @transform_18, window_bounds = array<i64: 2, 2>}, {transform_indices = @transform_19, window_bounds = array<i64: 2, 128>}]} {
    %c0 = arith.constant 0 : index
    %c0_0 = arith.constant 0 : index
    %0 = vector.load %arg1[%c0, %c0_0] : memref<2x256xf32, #tpu.memory_space<vmem>>, vector<2x256xf32>
    %c0_1 = arith.constant 0 : index
    %c0_2 = arith.constant 0 : index
    %1 = vector.load %arg2[%c0_1, %c0_2] : memref<256x784xf32, #tpu.memory_space<vmem>>, vector<256x784xf32>
    %cst = arith.constant dense<0.000000e+00> : vector<2x784xf32>
    %2 = tpu.matmul %0, %1, %cst {dimension_numbers = #tpu.dot_dimension_numbers<[1], [0], [0], [1], [0, 0, 1, 1], [], []>} : vector<2x256xf32>, vector<256x784xf32>, vector<2x784xf32> -> vector<2x784xf32>
    %c0_3 = arith.constant 0 : index
    %c0_4 = arith.constant 0 : index
    %3 = vector.load %arg3[%c0_3, %c0_4] : memref<1x784xf32, #tpu.memory_space<vmem>>, vector<1x784xf32>
    %4 = vector.broadcast %3 : vector<1x784xf32> to vector<2x784xf32>
    %5 = arith.addf %2, %4 : vector<2x784xf32>
    %cst_5 = arith.constant 0.000000e+00 : f32
    %6 = vector.broadcast %cst_5 : f32 to vector<2x784xf32>
    %7 = arith.maximumf %5, %6 : vector<2x784xf32>
    %c0_6 = arith.constant 0 : index
    %c0_7 = arith.constant 0 : index
    %8 = vector.load %arg4[%c0_6, %c0_7] : memref<784x144xf32, #tpu.memory_space<vmem>>, vector<784x144xf32>
    %cst_8 = arith.constant dense<0.000000e+00> : vector<2x144xf32>
    %9 = tpu.matmul %7, %8, %cst_8 {dimension_numbers = #tpu.dot_dimension_numbers<[1], [0], [0], [1], [0, 0, 1, 1], [], []>} : vector<2x784xf32>, vector<784x144xf32>, vector<2x144xf32> -> vector<2x144xf32>
    %c0_9 = arith.constant 0 : index
    %c0_10 = arith.constant 0 : index
    %10 = vector.load %arg5[%c0_9, %c0_10] : memref<1x144xf32, #tpu.memory_space<vmem>>, vector<1x144xf32>
    %11 = vector.broadcast %10 : vector<1x144xf32> to vector<2x144xf32>
    %12 = arith.addf %9, %11 : vector<2x144xf32>
    %cst_11 = arith.constant 0.000000e+00 : f32
    %13 = vector.broadcast %cst_11 : f32 to vector<2x144xf32>
    %14 = arith.maximumf %12, %13 : vector<2x144xf32>
    %c0_12 = arith.constant 0 : index
    %c0_13 = arith.constant 0 : index
    %15 = vector.load %arg6[%c0_12, %c0_13] : memref<144x16xf32, #tpu.memory_space<vmem>>, vector<144x16xf32>
    %cst_14 = arith.constant dense<0.000000e+00> : vector<2x16xf32>
    %16 = tpu.matmul %14, %15, %cst_14 {dimension_numbers = #tpu.dot_dimension_numbers<[1], [0], [0], [1], [0, 0, 1, 1], [], []>} : vector<2x144xf32>, vector<144x16xf32>, vector<2x16xf32> -> vector<2x16xf32>
    %c0_15 = arith.constant 0 : index
    %c0_16 = arith.constant 0 : index
    %17 = vector.load %arg7[%c0_15, %c0_16] : memref<1x16xf32, #tpu.memory_space<vmem>>, vector<1x16xf32>
    %18 = vector.broadcast %17 : vector<1x16xf32> to vector<2x16xf32>
    %19 = arith.addf %16, %18 : vector<2x16xf32>
    %cst_17 = arith.constant 0.000000e+00 : f32
    %20 = vector.broadcast %cst_17 : f32 to vector<2x16xf32>
    %21 = arith.maximumf %19, %20 : vector<2x16xf32>
    %c0_18 = arith.constant 0 : index
    %c0_19 = arith.constant 0 : index
    %22 = vector.load %arg8[%c0_18, %c0_19] : memref<16x64xf32, #tpu.memory_space<vmem>>, vector<16x64xf32>
    %cst_20 = arith.constant dense<0.000000e+00> : vector<2x64xf32>
    %23 = tpu.matmul %21, %22, %cst_20 {dimension_numbers = #tpu.dot_dimension_numbers<[1], [0], [0], [1], [0, 0, 1, 1], [], []>} : vector<2x16xf32>, vector<16x64xf32>, vector<2x64xf32> -> vector<2x64xf32>
    %c0_21 = arith.constant 0 : index
    %c0_22 = arith.constant 0 : index
    %24 = vector.load %arg9[%c0_21, %c0_22] : memref<1x64xf32, #tpu.memory_space<vmem>>, vector<1x64xf32>
    %25 = vector.broadcast %24 : vector<1x64xf32> to vector<2x64xf32>
    %26 = arith.addf %23, %25 : vector<2x64xf32>
    %cst_23 = arith.constant 0.000000e+00 : f32
    %27 = vector.broadcast %cst_23 : f32 to vector<2x64xf32>
    %28 = arith.maximumf %26, %27 : vector<2x64xf32>
    %c0_24 = arith.constant 0 : index
    %c0_25 = arith.constant 0 : index
    %29 = vector.load %arg10[%c0_24, %c0_25] : memref<64x64xf32, #tpu.memory_space<vmem>>, vector<64x64xf32>
    %cst_26 = arith.constant dense<0.000000e+00> : vector<2x64xf32>
    %30 = tpu.matmul %28, %29, %cst_26 {dimension_numbers = #tpu.dot_dimension_numbers<[1], [0], [0], [1], [0, 0, 1, 1], [], []>} : vector<2x64xf32>, vector<64x64xf32>, vector<2x64xf32> -> vector<2x64xf32>
    %c0_27 = arith.constant 0 : index
    %c0_28 = arith.constant 0 : index
    %31 = vector.load %arg11[%c0_27, %c0_28] : memref<1x64xf32, #tpu.memory_space<vmem>>, vector<1x64xf32>
    %32 = vector.broadcast %31 : vector<1x64xf32> to vector<2x64xf32>
    %33 = arith.addf %30, %32 : vector<2x64xf32>
    %c0_29 = arith.constant 0 : index
    %c0_30 = arith.constant 0 : index
    %34 = vector.load %arg12[%c0_29, %c0_30] : memref<16x64xf32, #tpu.memory_space<vmem>>, vector<16x64xf32>
    %cst_31 = arith.constant dense<0.000000e+00> : vector<2x64xf32>
    %35 = tpu.matmul %21, %34, %cst_31 {dimension_numbers = #tpu.dot_dimension_numbers<[1], [0], [0], [1], [0, 0, 1, 1], [], []>} : vector<2x16xf32>, vector<16x64xf32>, vector<2x64xf32> -> vector<2x64xf32>
    %c0_32 = arith.constant 0 : index
    %c0_33 = arith.constant 0 : index
    %36 = vector.load %arg13[%c0_32, %c0_33] : memref<1x64xf32, #tpu.memory_space<vmem>>, vector<1x64xf32>
    %37 = vector.broadcast %36 : vector<1x64xf32> to vector<2x64xf32>
    %38 = arith.addf %35, %37 : vector<2x64xf32>
    %cst_34 = arith.constant 0.000000e+00 : f32
    %39 = vector.broadcast %cst_34 : f32 to vector<2x64xf32>
    %40 = arith.maximumf %38, %39 : vector<2x64xf32>
    %c0_35 = arith.constant 0 : index
    %c0_36 = arith.constant 0 : index
    %41 = vector.load %arg14[%c0_35, %c0_36] : memref<64x1xf32, #tpu.memory_space<vmem>>, vector<64x1xf32>
    %cst_37 = arith.constant dense<0.000000e+00> : vector<2x1xf32>
    %42 = tpu.matmul %40, %41, %cst_37 {dimension_numbers = #tpu.dot_dimension_numbers<[1], [0], [0], [1], [0, 0, 1, 1], [], []>} : vector<2x64xf32>, vector<64x1xf32>, vector<2x1xf32> -> vector<2x1xf32>
    %c0_38 = arith.constant 0 : index
    %c0_39 = arith.constant 0 : index
    %43 = vector.load %arg15[%c0_38, %c0_39] : memref<1x1xf32, #tpu.memory_space<vmem>>, vector<1x1xf32>
    %44 = vector.broadcast %43 : vector<1x1xf32> to vector<2x1xf32>
    %45 = arith.addf %42, %44 : vector<2x1xf32>
    %c0_40 = arith.constant 0 : index
    %c0_41 = arith.constant 0 : index
    %46 = vector.load %arg16[%c0_40, %c0_41] : memref<64x2xf32, #tpu.memory_space<vmem>>, vector<64x2xf32>
    %cst_42 = arith.constant dense<0.000000e+00> : vector<2x2xf32>
    %47 = tpu.matmul %33, %46, %cst_42 {dimension_numbers = #tpu.dot_dimension_numbers<[1], [0], [0], [1], [0, 0, 1, 1], [], []>} : vector<2x64xf32>, vector<64x2xf32>, vector<2x2xf32> -> vector<2x2xf32>
    %c0_43 = arith.constant 0 : index
    %c0_44 = arith.constant 0 : index
    %48 = vector.load %arg17[%c0_43, %c0_44] : memref<1x2xf32, #tpu.memory_space<vmem>>, vector<1x2xf32>
    %49 = vector.broadcast %48 : vector<1x2xf32> to vector<2x2xf32>
    %50 = arith.addf %47, %49 : vector<2x2xf32>
    %c0_45 = arith.constant 0 : index
    %c0_46 = arith.constant 0 : index
    %51 = vector.load %arg18[%c0_45, %c0_46] : memref<1x2xf32, #tpu.memory_space<vmem>>, vector<1x2xf32>
    %c0_47 = arith.constant 0 : index
    %c0_48 = arith.constant 0 : index
    %52 = vector.load %arg19[%c0_47, %c0_48] : memref<2x2xf32, #tpu.memory_space<vmem>>, vector<2x2xf32>
    %53 = math.exp %51 : vector<1x2xf32>
    %54 = vector.broadcast %53 : vector<1x2xf32> to vector<2x2xf32>
    %55 = arith.mulf %52, %54 : vector<2x2xf32>
    %56 = arith.addf %50, %55 : vector<2x2xf32>
    %cst_49 = arith.constant -5.000000e-01 : f32
    %57 = vector.broadcast %cst_49 : f32 to vector<2x2xf32>
    %58 = arith.mulf %57, %52 : vector<2x2xf32>
    %59 = arith.mulf %58, %52 : vector<2x2xf32>
    %60 = vector.broadcast %51 : vector<1x2xf32> to vector<2x2xf32>
    %61 = arith.subf %59, %60 : vector<2x2xf32>
    %cst_50 = arith.constant dense<0.000000e+00> : vector<2xf32>
    %62 = vector.multi_reduction <add>, %61, %cst_50 [1] : vector<2x2xf32> to vector<2xf32>
    %63 = vector.shape_cast %62 : vector<2xf32> to vector<2x1xf32>
    %cst_51 = arith.constant 1.83787704 : f32
    %64 = vector.broadcast %cst_51 : f32 to vector<2x1xf32>
    %65 = arith.subf %63, %64 : vector<2x1xf32>
    %cst_52 = arith.constant 0.000000e+00 : f32
    %66 = vector.broadcast %cst_52 : f32 to vector<2x128xf32>
    %c0_53 = arith.constant 0 : index
    %c0_54 = arith.constant 0 : index
    %67 = vector.load %arg20[%c0_53, %c0_54] : memref<2x128xf32, #tpu.memory_space<vmem>>, vector<2x128xf32>
    tpu.vector_store %arg20[%c0_53, %c0_54], %66 {strides = array<i32>} : memref<2x128xf32, #tpu.memory_space<vmem>>, vector<2x128xf32>,
    %c0_55 = arith.constant 0 : index
    %c0_56 = arith.constant 0 : index
    %68 = vector.load %arg20[%c0_55, %c0_56] : memref<2x128xf32, #tpu.memory_space<vmem>>, vector<2x2xf32>
    tpu.vector_store %arg20[%c0_55, %c0_56], %56 {strides = array<i32>} : memref<2x128xf32, #tpu.memory_space<vmem>>, vector<2x2xf32>,
    %c0_57 = arith.constant 0 : index
    %c2 = arith.constant 2 : index
    %69 = vector.load %arg20[%c0_57, %c2] : memref<2x128xf32, #tpu.memory_space<vmem>>, vector<2x1xf32>
    tpu.vector_store %arg20[%c0_57, %c2], %45 {strides = array<i32>} : memref<2x128xf32, #tpu.memory_space<vmem>>, vector<2x1xf32>,
    %c0_58 = arith.constant 0 : index
    %c3 = arith.constant 3 : index
    %70 = vector.load %arg20[%c0_58, %c3] : memref<2x128xf32, #tpu.memory_space<vmem>>, vector<2x1xf32>
    tpu.vector_store %arg20[%c0_58, %c3], %65 {strides = array<i32>} : memref<2x128xf32, #tpu.memory_space<vmem>>, vector<2x1xf32>,
    return
  }
  func.func @transform_0(%arg0: i32) -> (i32, i32) {
    %c0_i32 = arith.constant 0 : i32
    %c0_i32_0 = arith.constant 0 : i32
    return %arg0, %c0_i32 : i32, i32
  }
  func.func @transform_1(%arg0: i32) -> (i32, i32) {
    %c0_i32 = arith.constant 0 : i32
    %c0_i32_0 = arith.constant 0 : i32
    %c0_i32_1 = arith.constant 0 : i32
    return %c0_i32, %c0_i32_0 : i32, i32
  }
  func.func @transform_2(%arg0: i32) -> (i32, i32) {
    %c0_i32 = arith.constant 0 : i32
    %c0_i32_0 = arith.constant 0 : i32
    %c0_i32_1 = arith.constant 0 : i32
    return %c0_i32, %c0_i32_0 : i32, i32
  }
  func.func @transform_3(%arg0: i32) -> (i32, i32) {
    %c0_i32 = arith.constant 0 : i32
    %c0_i32_0 = arith.constant 0 : i32
    %c0_i32_1 = arith.constant 0 : i32
    return %c0_i32, %c0_i32_0 : i32, i32
  }
  func.func @transform_4(%arg0: i32) -> (i32, i32) {
    %c0_i32 = arith.constant 0 : i32
    %c0_i32_0 = arith.constant 0 : i32
    %c0_i32_1 = arith.constant 0 : i32
    return %c0_i32, %c0_i32_0 : i32, i32
  }
  func.func @transform_5(%arg0: i32) -> (i32, i32) {
    %c0_i32 = arith.constant 0 : i32
    %c0_i32_0 = arith.constant 0 : i32
    %c0_i32_1 = arith.constant 0 : i32
    return %c0_i32, %c0_i32_0 : i32, i32
  }
  func.func @transform_6(%arg0: i32) -> (i32, i32) {
    %c0_i32 = arith.constant 0 : i32
    %c0_i32_0 = arith.constant 0 : i32
    %c0_i32_1 = arith.constant 0 : i32
    return %c0_i32, %c0_i32_0 : i32, i32
  }
  func.func @transform_7(%arg0: i32) -> (i32, i32) {
    %c0_i32 = arith.constant 0 : i32
    %c0_i32_0 = arith.constant 0 : i32
    %c0_i32_1 = arith.constant 0 : i32
    return %c0_i32, %c0_i32_0 : i32, i32
  }
  func.func @transform_8(%arg0: i32) -> (i32, i32) {
    %c0_i32 = arith.constant 0 : i32
    %c0_i32_0 = arith.constant 0 : i32
    %c0_i32_1 = arith.constant 0 : i32
    return %c0_i32, %c0_i32_0 : i32, i32
  }
  func.func @transform_9(%arg0: i32) -> (i32, i32) {
    %c0_i32 = arith.constant 0 : i32
    %c0_i32_0 = arith.constant 0 : i32
    %c0_i32_1 = arith.constant 0 : i32
    return %c0_i32, %c0_i32_0 : i32, i32
  }
  func.func @transform_10(%arg0: i32) -> (i32, i32) {
    %c0_i32 = arith.constant 0 : i32
    %c0_i32_0 = arith.constant 0 : i32
    %c0_i32_1 = arith.constant 0 : i32
    return %c0_i32, %c0_i32_0 : i32, i32
  }
  func.func @transform_11(%arg0: i32) -> (i32, i32) {
    %c0_i32 = arith.constant 0 : i32
    %c0_i32_0 = arith.constant 0 : i32
    %c0_i32_1 = arith.constant 0 : i32
    return %c0_i32, %c0_i32_0 : i32, i32
  }
  func.func @transform_12(%arg0: i32) -> (i32, i32) {
    %c0_i32 = arith.constant 0 : i32
    %c0_i32_0 = arith.constant 0 : i32
    %c0_i32_1 = arith.constant 0 : i32
    return %c0_i32, %c0_i32_0 : i32, i32
  }
  func.func @transform_13(%arg0: i32) -> (i32, i32) {
    %c0_i32 = arith.constant 0 : i32
    %c0_i32_0 = arith.constant 0 : i32
    %c0_i32_1 = arith.constant 0 : i32
    return %c0_i32, %c0_i32_0 : i32, i32
  }
  func.func @transform_14(%arg0: i32) -> (i32, i32) {
    %c0_i32 = arith.constant 0 : i32
    %c0_i32_0 = arith.constant 0 : i32
    %c0_i32_1 = arith.constant 0 : i32
    return %c0_i32, %c0_i32_0 : i32, i32
  }
  func.func @transform_15(%arg0: i32) -> (i32, i32) {
    %c0_i32 = arith.constant 0 : i32
    %c0_i32_0 = arith.constant 0 : i32
    %c0_i32_1 = arith.constant 0 : i32
    return %c0_i32, %c0_i32_0 : i32, i32
  }
  func.func @transform_16(%arg0: i32) -> (i32, i32) {
    %c0_i32 = arith.constant 0 : i32
    %c0_i32_0 = arith.constant 0 : i32
    %c0_i32_1 = arith.constant 0 : i32
    return %c0_i32, %c0_i32_0 : i32, i32
  }
  func.func @transform_17(%arg0: i32) -> (i32, i32) {
    %c0_i32 = arith.constant 0 : i32
    %c0_i32_0 = arith.constant 0 : i32
    %c0_i32_1 = arith.constant 0 : i32
    return %c0_i32, %c0_i32_0 : i32, i32
  }
  func.func @transform_18(%arg0: i32) -> (i32, i32) {
    %c0_i32 = arith.constant 0 : i32
    %c0_i32_0 = arith.constant 0 : i32
    return %arg0, %c0_i32 : i32, i32
  }
  func.func @transform_19(%arg0: i32) -> (i32, i32) {
    %c0_i32 = arith.constant 0 : i32
    %c0_i32_0 = arith.constant 0 : i32
    return %arg0, %c0_i32 : i32, i32
  }
}

</mosaic_0001>

<llo_original>
// kernel: actor_critic_forward.1
$region0: #{actor_critic_forward.1}
  #allocation0 [shape = 'u32[]', space=smem, size = 0x4, offset = 0x4, fixed_abs, tag = 'smem constant byte address 0x4 - core index']
  #allocation1 [shape = 'u32[72,128]{1,0:T(1,128)}', space=vmem, size = 0x9000, scoped, tag = 'internal scratch']
  #allocation2 [shape = 'f32[1,1]{1,0:T(1,128)S(1)}', space=vmem, size = 0x200, scoped, tag = 'scoped memory for actor_critic_forward.1']
  %s0 = inlined_call_operand.vmem [shape: f32[2,256], index: 0, kind: input, shape index: {}]
  %s1 = inlined_call_operand.vmem [shape: f32[256,784], index: 1, kind: input, shape index: {}]
  %s2 = inlined_call_operand.vmem [shape: f32[1,784], index: 2, kind: input, shape index: {}]
  %s3 = inlined_call_operand.vmem [shape: f32[784,144], index: 3, kind: input, shape index: {}]
  %s4 = inlined_call_operand.vmem [shape: f32[1,144], index: 4, kind: input, shape index: {}]
  %s5 = inlined_call_operand.vmem [shape: f32[144,16], index: 5, kind: input, shape index: {}]
  %s6 = inlined_call_operand.vmem [shape: f32[1,16], index: 6, kind: input, shape index: {}]
  %s7 = inlined_call_operand.vmem [shape: f32[16,64], index: 7, kind: input, shape index: {}]
  %s8 = inlined_call_operand.vmem [shape: f32[1,64], index: 8, kind: input, shape index: {}]
  %s9 = inlined_call_operand.vmem [shape: f32[64,64], index: 9, kind: input, shape index: {}]
  %s10 = inlined_call_operand.vmem [shape: f32[1,64], index: 10, kind: input, shape index: {}]
  %s11 = inlined_call_operand.vmem [shape: f32[16,64], index: 11, kind: input, shape index: {}]
  %s12 = inlined_call_operand.vmem [shape: f32[1,64], index: 12, kind: input, shape index: {}]
  %s13 = inlined_call_operand.vmem [shape: f32[64,1], index: 13, kind: input, shape index: {}]
  %s14 = inlined_call_operand.<no memory space> [shape: f32[1,1], index: 14, kind: input, shape index: {}]
  %s15 = inlined_call_operand.vmem [shape: f32[64,2], index: 15, kind: input, shape index: {}]
  %s16 = inlined_call_operand.vmem [shape: f32[1,2], index: 16, kind: input, shape index: {}]
  %s17 = inlined_call_operand.vmem [shape: f32[1,2], index: 17, kind: input, shape index: {}]
  %s18 = inlined_call_operand.vmem [shape: f32[2,2], index: 18, kind: input, shape index: {}]
  %s19 = inlined_call_operand.vmem [shape: f32[2,128], index: 19, kind: output, shape index: {}]
  %s20 = sld [smem:[#allocation0]]
  $region86: #{actor_critic_forward.1} parent=0
    _
  %s22 = ssub.s32 1, %s20
  %s23 = scalar_select 0, %s22, %s20
  %v24 = vstv %s14
  %25 = vst [vmem:[#allocation2] sm:$0x1] %v24
  // Predicated region
  $region2: #{actor_critic_forward.1} parent=0 // pred_check
    _
  $region3: #{actor_critic_forward.1} parent=0 // pred_check_branch
    %27 = sbr.rel (0) target = $region5
  $region4: #{actor_critic_forward.1} parent=0 // pred_region
    _
  $region5: #{actor_critic_forward.1} parent=0 // pred_fallthru
    _
  // Predicated region
  $region6: #{actor_critic_forward.1} parent=0 // pred_check
    _
  $region7: #{actor_critic_forward.1} parent=0 // pred_check_branch
    %29 = sbr.rel (0) target = $region9
  $region8: #{actor_critic_forward.1} parent=0 // pred_region
    _
  $region9: #{actor_critic_forward.1} parent=0 // pred_fallthru
    _
  // Predicated region
  $region10: #{actor_critic_forward.1} parent=0 // pred_check
    _
  $region11: #{actor_critic_forward.1} parent=0 // pred_check_branch
    %31 = sbr.rel (0) target = $region13
  $region12: #{actor_critic_forward.1} parent=0 // pred_region
    _
  $region13: #{actor_critic_forward.1} parent=0 // pred_fallthru
    _
  // Predicated region
  $region14: #{actor_critic_forward.1} parent=0 // pred_check
    _
  $region15: #{actor_critic_forward.1} parent=0 // pred_check_branch
    %33 = sbr.rel (0) target = $region17
  $region16: #{actor_critic_forward.1} parent=0 // pred_region
    _
  $region17: #{actor_critic_forward.1} parent=0 // pred_fallthru
    _
  // Predicated region
  $region18: #{actor_critic_forward.1} parent=0 // pred_check
    _
  $region19: #{actor_critic_forward.1} parent=0 // pred_check_branch
    %35 = sbr.rel (0) target = $region21
  $region20: #{actor_critic_forward.1} parent=0 // pred_region
    _
  $region21: #{actor_critic_forward.1} parent=0 // pred_fallthru
    _
  // Predicated region
  $region22: #{actor_critic_forward.1} parent=0 // pred_check
    _
  $region23: #{actor_critic_forward.1} parent=0 // pred_check_branch
    %37 = sbr.rel (0) target = $region25
  $region24: #{actor_critic_forward.1} parent=0 // pred_region
    _
  $region25: #{actor_critic_forward.1} parent=0 // pred_fallthru
    _
  // Predicated region
  $region26: #{actor_critic_forward.1} parent=0 // pred_check
    _
  $region27: #{actor_critic_forward.1} parent=0 // pred_check_branch
    %39 = sbr.rel (0) target = $region29
  $region28: #{actor_critic_forward.1} parent=0 // pred_region
    _
  $region29: #{actor_critic_forward.1} parent=0 // pred_fallthru
    _
  // Predicated region
  $region30: #{actor_critic_forward.1} parent=0 // pred_check
    _
  $region31: #{actor_critic_forward.1} parent=0 // pred_check_branch
    %41 = sbr.rel (0) target = $region33
  $region32: #{actor_critic_forward.1} parent=0 // pred_region
    _
  $region33: #{actor_critic_forward.1} parent=0 // pred_fallthru
    _
  // Predicated region
  $region34: #{actor_critic_forward.1} parent=0 // pred_check
    _
  $region35: #{actor_critic_forward.1} parent=0 // pred_check_branch
    %43 = sbr.rel (0) target = $region37
  $region36: #{actor_critic_forward.1} parent=0 // pred_region
    _
  $region37: #{actor_critic_forward.1} parent=0 // pred_fallthru
    _
  // Predicated region
  $region38: #{actor_critic_forward.1} parent=0 // pred_check
    _
  $region39: #{actor_critic_forward.1} parent=0 // pred_check_branch
    %45 = sbr.rel (0) target = $region41
  $region40: #{actor_critic_forward.1} parent=0 // pred_region
    _
  $region41: #{actor_critic_forward.1} parent=0 // pred_fallthru
    _
  // Predicated region
  $region42: #{actor_critic_forward.1} parent=0 // pred_check
    _
  $region43: #{actor_critic_forward.1} parent=0 // pred_check_branch
    %47 = sbr.rel (0) target = $region45
  $region44: #{actor_critic_forward.1} parent=0 // pred_region
    _
  $region45: #{actor_critic_forward.1} parent=0 // pred_fallthru
    _
  // Predicated region
  $region46: #{actor_critic_forward.1} parent=0 // pred_check
    _
  $region47: #{actor_critic_forward.1} parent=0 // pred_check_branch
    %49 = sbr.rel (0) target = $region49
  $region48: #{actor_critic_forward.1} parent=0 // pred_region
    _
  $region49: #{actor_critic_forward.1} parent=0 // pred_fallthru
    _
  // Predicated region
  $region50: #{actor_critic_forward.1} parent=0 // pred_check
    _
  $region51: #{actor_critic_forward.1} parent=0 // pred_check_branch
    %51 = sbr.rel (0) target = $region53
  $region52: #{actor_critic_forward.1} parent=0 // pred_region
    _
  $region53: #{actor_critic_forward.1} parent=0 // pred_fallthru
    _
  // Predicated region
  $region54: #{actor_critic_forward.1} parent=0 // pred_check
    _
  $region55: #{actor_critic_forward.1} parent=0 // pred_check_branch
    %53 = sbr.rel (0) target = $region57
  $region56: #{actor_critic_forward.1} parent=0 // pred_region
    _
  $region57: #{actor_critic_forward.1} parent=0 // pred_fallthru
    _
  // Predicated region
  $region58: #{actor_critic_forward.1} parent=0 // pred_check
    _
  $region59: #{actor_critic_forward.1} parent=0 // pred_check_branch
    %55 = sbr.rel (0) target = $region61
  $region60: #{actor_critic_forward.1} parent=0 // pred_region
    _
  $region61: #{actor_critic_forward.1} parent=0 // pred_fallthru
    _
  // Predicated region
  $region62: #{actor_critic_forward.1} parent=0 // pred_check
    _
  $region63: #{actor_critic_forward.1} parent=0 // pred_check_branch
    %57 = sbr.rel (0) target = $region65
  $region64: #{actor_critic_forward.1} parent=0 // pred_region
    _
  $region65: #{actor_critic_forward.1} parent=0 // pred_fallthru
    _
  // Predicated region
  $region66: #{actor_critic_forward.1} parent=0 // pred_check
    _
  $region67: #{actor_critic_forward.1} parent=0 // pred_check_branch
    %59 = sbr.rel (0) target = $region69
  $region68: #{actor_critic_forward.1} parent=0 // pred_region
    _
  $region69: #{actor_critic_forward.1} parent=0 // pred_fallthru
    _
  // Predicated region
  $region70: #{actor_critic_forward.1} parent=0 // pred_check
    _
  $region71: #{actor_critic_forward.1} parent=0 // pred_check_branch
    %61 = sbr.rel (0) target = $region73
  $region72: #{actor_critic_forward.1} parent=0 // pred_region
    _
  $region73: #{actor_critic_forward.1} parent=0 // pred_fallthru
    _
  // Predicated region
  $region74: #{actor_critic_forward.1} parent=0 // pred_check
    _
  $region75: #{actor_critic_forward.1} parent=0 // pred_check_branch
    %63 = sbr.rel (0) target = $region77
  $region76: #{actor_critic_forward.1} parent=0 // pred_region
    _
  $region77: #{actor_critic_forward.1} parent=0 // pred_fallthru
    _
  %v64 = vld [vmem:[%s0] sm:$0xf]
  %v65 = vld [vmem:[%s1] sm:$0xff]
  %v66 = vld [vmem:[%s1 + $0x8] sm:$0xff]
  %v67 = vld [vmem:[%s1 + $0x10] sm:$0xff]
  %v68 = vld [vmem:[%s1 + $0x18] sm:$0xff]
  %v69 = vld [vmem:[%s1 + $0x20] sm:$0xff]
  %v70 = vld [vmem:[%s1 + $0x28] sm:$0xff]
  %v71 = vld [vmem:[%s1 + $0x30] sm:$0xff]
  %v72 = vld [vmem:[%s1 + $0x38] sm:$0xff]
  %v73 = vld [vmem:[%s1 + $0x40] sm:$0xff]
  %v74 = vld [vmem:[%s1 + $0x48] sm:$0xff]
  %v75 = vld [vmem:[%s1 + $0x50] sm:$0xff]
  %v76 = vld [vmem:[%s1 + $0x58] sm:$0xff]
  %v77 = vld [vmem:[%s1 + $0x60] sm:$0xff]
  %v78 = vld [vmem:[%s1 + $0x68] sm:$0xff]
  %v79 = vld [vmem:[%s1 + $0x70] sm:$0xff]
  %v80 = vld [vmem:[%s1 + $0x78] sm:$0xff]
  %v81 = vld [vmem:[%s1 + $0x80] sm:$0xff]
  %v82 = vld [vmem:[%s1 + $0x88] sm:$0xff]
  %v83 = vld [vmem:[%s1 + $0x90] sm:$0xff]
  %v84 = vld [vmem:[%s1 + $0x98] sm:$0xff]
  %v85 = vld [vmem:[%s1 + $0xa0] sm:$0xff]
  %v86 = vld [vmem:[%s1 + $0xa8] sm:$0xff]
  %v87 = vld [vmem:[%s1 + $0xb0] sm:$0xff]
  %v88 = vld [vmem:[%s1 + $0xb8] sm:$0xff]
  %v89 = vld [vmem:[%s1 + $0xc0] sm:$0xff]
  %v90 = vld [vmem:[%s1 + $0xc8] sm:$0xff]
  %v91 = vld [vmem:[%s1 + $0xd0] sm:$0xff]
  %v92 = vld [vmem:[%s1 + $0xd8] sm:$0xff]
  %v93 = vld [vmem:[%s1 + $0xe0] sm:$0xff]
  %v94 = vld [vmem:[%s1 + $0xe8] sm:$0xff]
  %v95 = vld [vmem:[%s1 + $0xf0] sm:$0xff]
  %v96 = vld [vmem:[%s1 + $0xf8] sm:$0xff]
  %v97 = vld [vmem:[%s1 + $0x100] sm:$0xff]
  %v98 = vld [vmem:[%s1 + $0x108] sm:$0xff]
  %v99 = vld [vmem:[%s1 + $0x110] sm:$0xff]
  %v100 = vld [vmem:[%s1 + $0x118] sm:$0xff]
  %v101 = vld [vmem:[%s1 + $0x120] sm:$0xff]
  %v102 = vld [vmem:[%s1 + $0x128] sm:$0xff]
  %v103 = vld [vmem:[%s1 + $0x130] sm:$0xff]
  %v104 = vld [vmem:[%s1 + $0x138] sm:$0xff]
  %v105 = vld [vmem:[%s1 + $0x140] sm:$0xff]
  %v106 = vld [vmem:[%s1 + $0x148] sm:$0xff]
  %v107 = vld [vmem:[%s1 + $0x150] sm:$0xff]
  %v108 = vld [vmem:[%s1 + $0x158] sm:$0xff]
  %v109 = vld [vmem:[%s1 + $0x160] sm:$0xff]
  %v110 = vld [vmem:[%s1 + $0x168] sm:$0xff]
  %v111 = vld [vmem:[%s1 + $0x170] sm:$0xff]
  %v112 = vld [vmem:[%s1 + $0x178] sm:$0xff]
  %v113 = vld [vmem:[%s1 + $0x180] sm:$0xff]
  %v114 = vld [vmem:[%s1 + $0x188] sm:$0xff]
  %v115 = vld [vmem:[%s1 + $0x190] sm:$0xff]
  %v116 = vld [vmem:[%s1 + $0x198] sm:$0xff]
  %v117 = vld [vmem:[%s1 + $0x1a0] sm:$0xff]
  %v118 = vld [vmem:[%s1 + $0x1a8] sm:$0xff]
  %v119 = vld [vmem:[%s1 + $0x1b0] sm:$0xff]
  %v120 = vld [vmem:[%s1 + $0x1b8] sm:$0xff]
  %v121 = vld [vmem:[%s1 + $0x1c0] sm:$0xff]
  %v122 = vld [vmem:[%s1 + $0x1c8] sm:$0xff]
  %v123 = vld [vmem:[%s1 + $0x1d0] sm:$0xff]
  %v124 = vld [vmem:[%s1 + $0x1d8] sm:$0xff]
  %v125 = vld [vmem:[%s1 + $0x1e0] sm:$0xff]
  %v126 = vld [vmem:[%s1 + $0x1e8] sm:$0xff]
  %v127 = vld [vmem:[%s1 + $0x1f0] sm:$0xff]
  %v128 = vld [vmem:[%s1 + $0x1f8] sm:$0xff]
  %v129 = vld [vmem:[%s1 + $0x200] sm:$0xff]
  %v130 = vld [vmem:[%s1 + $0x208] sm:$0xff]
  %v131 = vld [vmem:[%s1 + $0x210] sm:$0xff]
  %v132 = vld [vmem:[%s1 + $0x218] sm:$0xff]
  %v133 = vld [vmem:[%s1 + $0x220] sm:$0xff]
  %v134 = vld [vmem:[%s1 + $0x228] sm:$0xff]
  %v135 = vld [vmem:[%s1 + $0x230] sm:$0xff]
  %v136 = vld [vmem:[%s1 + $0x238] sm:$0xff]
  %v137 = vld [vmem:[%s1 + $0x240] sm:$0xff]
  %v138 = vld [vmem:[%s1 + $0x248] sm:$0xff]
  %v139 = vld [vmem:[%s1 + $0x250] sm:$0xff]
  %v140 = vld [vmem:[%s1 + $0x258] sm:$0xff]
  %v141 = vld [vmem:[%s1 + $0x260] sm:$0xff]
  %v142 = vld [vmem:[%s1 + $0x268] sm:$0xff]
  %v143 = vld [vmem:[%s1 + $0x270] sm:$0xff]
  %v144 = vld [vmem:[%s1 + $0x278] sm:$0xff]
  %v145 = vld [vmem:[%s1 + $0x280] sm:$0xff]
  %v146 = vld [vmem:[%s1 + $0x288] sm:$0xff]
  %v147 = vld [vmem:[%s1 + $0x290] sm:$0xff]
  %v148 = vld [vmem:[%s1 + $0x298] sm:$0xff]
  %v149 = vld [vmem:[%s1 + $0x2a0] sm:$0xff]
  %v150 = vld [vmem:[%s1 + $0x2a8] sm:$0xff]
  %v151 = vld [vmem:[%s1 + $0x2b0] sm:$0xff]
  %v152 = vld [vmem:[%s1 + $0x2b8] sm:$0xff]
  %v153 = vld [vmem:[%s1 + $0x2c0] sm:$0xff]
  %v154 = vld [vmem:[%s1 + $0x2c8] sm:$0xff]
  %v155 = vld [vmem:[%s1 + $0x2d0] sm:$0xff]
  %v156 = vld [vmem:[%s1 + $0x2d8] sm:$0xff]
  %v157 = vld [vmem:[%s1 + $0x2e0] sm:$0xff]
  %v158 = vld [vmem:[%s1 + $0x2e8] sm:$0xff]
  %v159 = vld [vmem:[%s1 + $0x2f0] sm:$0xff]
  %v160 = vld [vmem:[%s1 + $0x2f8] sm:$0xff]
  %v161 = vld [vmem:[%s1 + $0x300] sm:$0xff]
  %v162 = vld [vmem:[%s1 + $0x308] sm:$0xff]
  %v163 = vld [vmem:[%s1 + $0x310] sm:$0xff]
  %v164 = vld [vmem:[%s1 + $0x318] sm:$0xff]
  %v165 = vld [vmem:[%s1 + $0x320] sm:$0xff]
  %v166 = vld [vmem:[%s1 + $0x328] sm:$0xff]
  %v167 = vld [vmem:[%s1 + $0x330] sm:$0xff]
  %v168 = vld [vmem:[%s1 + $0x338] sm:$0xff]
  %v169 = vld [vmem:[%s1 + $0x340] sm:$0xff]
  %v170 = vld [vmem:[%s1 + $0x348] sm:$0xff]
  %v171 = vld [vmem:[%s1 + $0x350] sm:$0xff]
  %v172 = vld [vmem:[%s1 + $0x358] sm:$0xff]
  %v173 = vld [vmem:[%s1 + $0x360] sm:$0xff]
  %v174 = vld [vmem:[%s1 + $0x368] sm:$0xff]
  %v175 = vld [vmem:[%s1 + $0x370] sm:$0xff]
  %v176 = vld [vmem:[%s1 + $0x378] sm:$0xff]
  %v177 = vld [vmem:[%s1 + $0x380] sm:$0xff]
  %v178 = vld [vmem:[%s1 + $0x388] sm:$0xff]
  %v179 = vld [vmem:[%s1 + $0x390] sm:$0xff]
  %v180 = vld [vmem:[%s1 + $0x398] sm:$0xff]
  %v181 = vld [vmem:[%s1 + $0x3a0] sm:$0xff]
  %v182 = vld [vmem:[%s1 + $0x3a8] sm:$0xff]
  %v183 = vld [vmem:[%s1 + $0x3b0] sm:$0xff]
  %v184 = vld [vmem:[%s1 + $0x3b8] sm:$0xff]
  %v185 = vld [vmem:[%s1 + $0x3c0] sm:$0xff]
  %v186 = vld [vmem:[%s1 + $0x3c8] sm:$0xff]
  %v187 = vld [vmem:[%s1 + $0x3d0] sm:$0xff]
  %v188 = vld [vmem:[%s1 + $0x3d8] sm:$0xff]
  %v189 = vld [vmem:[%s1 + $0x3e0] sm:$0xff]
  %v190 = vld [vmem:[%s1 + $0x3e8] sm:$0xff]
  %v191 = vld [vmem:[%s1 + $0x3f0] sm:$0xff]
  %v192 = vld [vmem:[%s1 + $0x3f8] sm:$0xff]
  %v193 = vld [vmem:[%s1 + $0x400] sm:$0xff]
  %v194 = vld [vmem:[%s1 + $0x408] sm:$0xff]
  %v195 = vld [vmem:[%s1 + $0x410] sm:$0xff]
  %v196 = vld [vmem:[%s1 + $0x418] sm:$0xff]
  %v197 = vld [vmem:[%s1 + $0x420] sm:$0xff]
  %v198 = vld [vmem:[%s1 + $0x428] sm:$0xff]
  %v199 = vld [vmem:[%s1 + $0x430] sm:$0xff]
  %v200 = vld [vmem:[%s1 + $0x438] sm:$0xff]
  %v201 = vld [vmem:[%s1 + $0x440] sm:$0xff]
  %v202 = vld [vmem:[%s1 + $0x448] sm:$0xff]
  %v203 = vld [vmem:[%s1 + $0x450] sm:$0xff]
  %v204 = vld [vmem:[%s1 + $0x458] sm:$0xff]
  %v205 = vld [vmem:[%s1 + $0x460] sm:$0xff]
  %v206 = vld [vmem:[%s1 + $0x468] sm:$0xff]
  %v207 = vld [vmem:[%s1 + $0x470] sm:$0xff]
  %v208 = vld [vmem:[%s1 + $0x478] sm:$0xff]
  %v209 = vld [vmem:[%s1 + $0x480] sm:$0xff]
  %v210 = vld [vmem:[%s1 + $0x488] sm:$0xff]
  %v211 = vld [vmem:[%s1 + $0x490] sm:$0xff]
  %v212 = vld [vmem:[%s1 + $0x498] sm:$0xff]
  %v213 = vld [vmem:[%s1 + $0x4a0] sm:$0xff]
  %v214 = vld [vmem:[%s1 + $0x4a8] sm:$0xff]
  %v215 = vld [vmem:[%s1 + $0x4b0] sm:$0xff]
  %v216 = vld [vmem:[%s1 + $0x4b8] sm:$0xff]
  %v217 = vld [vmem:[%s1 + $0x4c0] sm:$0xff]
  %v218 = vld [vmem:[%s1 + $0x4c8] sm:$0xff]
  %v219 = vld [vmem:[%s1 + $0x4d0] sm:$0xff]
  %v220 = vld [vmem:[%s1 + $0x4d8] sm:$0xff]
  %v221 = vld [vmem:[%s1 + $0x4e0] sm:$0xff]
  %v222 = vld [vmem:[%s1 + $0x4e8] sm:$0xff]
  %v223 = vld [vmem:[%s1 + $0x4f0] sm:$0xff]
  %v224 = vld [vmem:[%s1 + $0x4f8] sm:$0xff]
  %v225 = vld [vmem:[%s1 + $0x500] sm:$0xff]
  %v226 = vld [vmem:[%s1 + $0x508] sm:$0xff]
  %v227 = vld [vmem:[%s1 + $0x510] sm:$0xff]
  %v228 = vld [vmem:[%s1 + $0x518] sm:$0xff]
  %v229 = vld [vmem:[%s1 + $0x520] sm:$0xff]
  %v230 = vld [vmem:[%s1 + $0x528] sm:$0xff]
  %v231 = vld [vmem:[%s1 + $0x530] sm:$0xff]
  %v232 = vld [vmem:[%s1 + $0x538] sm:$0xff]
  %v233 = vld [vmem:[%s1 + $0x540] sm:$0xff]
  %v234 = vld [vmem:[%s1 + $0x548] sm:$0xff]
  %v235 = vld [vmem:[%s1 + $0x550] sm:$0xff]
  %v236 = vld [vmem:[%s1 + $0x558] sm:$0xff]
  %v237 = vld [vmem:[%s1 + $0x560] sm:$0xff]
  %v238 = vld [vmem:[%s1 + $0x568] sm:$0xff]
  %v239 = vld [vmem:[%s1 + $0x570] sm:$0xff]
  %v240 = vld [vmem:[%s1 + $0x578] sm:$0xff]
  %v241 = vld [vmem:[%s1 + $0x580] sm:$0xff]
  %v242 = vld [vmem:[%s1 + $0x588] sm:$0xff]
  %v243 = vld [vmem:[%s1 + $0x590] sm:$0xff]
  %v244 = vld [vmem:[%s1 + $0x598] sm:$0xff]
  %v245 = vld [vmem:[%s1 + $0x5a0] sm:$0xff]
  %v246 = vld [vmem:[%s1 + $0x5a8] sm:$0xff]
  %v247 = vld [vmem:[%s1 + $0x5b0] sm:$0xff]
  %v248 = vld [vmem:[%s1 + $0x5b8] sm:$0xff]
  %v249 = vld [vmem:[%s1 + $0x5c0] sm:$0xff]
  %v250 = vld [vmem:[%s1 + $0x5c8] sm:$0xff]
  %v251 = vld [vmem:[%s1 + $0x5d0] sm:$0xff]
  %v252 = vld [vmem:[%s1 + $0x5d8] sm:$0xff]
  %v253 = vld [vmem:[%s1 + $0x5e0] sm:$0xff]
  %v254 = vld [vmem:[%s1 + $0x5e8] sm:$0xff]
  %v255 = vld [vmem:[%s1 + $0x5f0] sm:$0xff]
  %v256 = vld [vmem:[%s1 + $0x5f8] sm:$0xff]
  %v257 = vld [vmem:[%s1 + $0x600] sm:$0xff]
  %v258 = vld [vmem:[%s1 + $0x608] sm:$0xff]
  %v259 = vld [vmem:[%s1 + $0x610] sm:$0xff]
  %v260 = vld [vmem:[%s1 + $0x618] sm:$0xff]
  %v261 = vld [vmem:[%s1 + $0x620] sm:$0xff]
  %v262 = vld [vmem:[%s1 + $0x628] sm:$0xff]
  %v263 = vld [vmem:[%s1 + $0x630] sm:$0xff]
  %v264 = vld [vmem:[%s1 + $0x638] sm:$0xff]
  %v265 = vld [vmem:[%s1 + $0x640] sm:$0xff]
  %v266 = vld [vmem:[%s1 + $0x648] sm:$0xff]
  %v267 = vld [vmem:[%s1 + $0x650] sm:$0xff]
  %v268 = vld [vmem:[%s1 + $0x658] sm:$0xff]
  %v269 = vld [vmem:[%s1 + $0x660] sm:$0xff]
  %v270 = vld [vmem:[%s1 + $0x668] sm:$0xff]
  %v271 = vld [vmem:[%s1 + $0x670] sm:$0xff]
  %v272 = vld [vmem:[%s1 + $0x678] sm:$0xff]
  %v273 = vld [vmem:[%s1 + $0x680] sm:$0xff]
  %v274 = vld [vmem:[%s1 + $0x688] sm:$0xff]
  %v275 = vld [vmem:[%s1 + $0x690] sm:$0xff]
  %v276 = vld [vmem:[%s1 + $0x698] sm:$0xff]
  %v277 = vld [vmem:[%s1 + $0x6a0] sm:$0xff]
  %v278 = vld [vmem:[%s1 + $0x6a8] sm:$0xff]
  %v279 = vld [vmem:[%s1 + $0x6b0] sm:$0xff]
  %v280 = vld [vmem:[%s1 + $0x6b8] sm:$0xff]
  %v281 = vld [vmem:[%s1 + $0x6c0] sm:$0xff]
  %v282 = vld [vmem:[%s1 + $0x6c8] sm:$0xff]
  %v283 = vld [vmem:[%s1 + $0x6d0] sm:$0xff]
  %v284 = vld [vmem:[%s1 + $0x6d8] sm:$0xff]
  %v285 = vld [vmem:[%s1 + $0x6e0] sm:$0xff]
  %v286 = vld [vmem:[%s1 + $0x6e8] sm:$0xff]
  %v287 = vld [vmem:[%s1 + $0x6f0] sm:$0xff]
  %v288 = vld [vmem:[%s1 + $0x6f8] sm:$0xff]
  %v289 = vld [vmem:[%s2] sm:$0x7f]
  %v291 = vperm.slane %v289, 0
  %v292 = vperm.slane %v289, 1
  %v293 = vperm.slane %v289, 2
  %v294 = vperm.slane %v289, 3
  %v295 = vperm.slane %v289, 4
  %v296 = vperm.slane %v289, 5
  %v297 = vperm.slane %v289, 6
  %306 = vst [vmem:[#allocation1] ss:$4 sm:$0xff] %v64
  %v307 = vld.sshfl [vmem:[#allocation1] sm:$0xff pattern:$0x73625140]
  %v308 = vld.sshfl [vmem:[#allocation1 + $0x8] sm:$0xff pattern:$0x73625140]
  %311 = vmatpush.msra.mxu0 %v170
  %312 = vmatpush.msra.mxu0 %v163
  %313 = vmatpush.msra.mxu0 %v156
  %314 = vmatpush.msra.mxu0 %v149
  %315 = vmatpush.msra.mxu0 %v142
  %316 = vmatpush.msra.mxu0 %v135
  %317 = vmatpush.msra.mxu0 %v128
  %318 = vmatpush.msra.mxu0 %v121
  %319 = vmatpush.msra.mxu0 %v114
  %320 = vmatpush.msra.mxu0 %v107
  %321 = vmatpush.msra.mxu0 %v100
  %322 = vmatpush.msra.mxu0 %v93
  %323 = vmatpush.msra.mxu0 %v86
  %324 = vmatpush.msra.mxu0 %v79
  %325 = vmatpush.msra.mxu0 %v72
  %326 = vmatpush.msra.mxu0 %v65
  %327 = vmatmul.f32.gmra.mxu0 %v307
  %v328 = vpop.f32.mrf.mxu0
  %v329 = vadd.f32 %v291, %v328
  %330 = vdwg.mxu0
  %331 = vmatpush.msra.mxu0 %v282
  %332 = vmatpush.msra.mxu0 %v275
  %333 = vmatpush.msra.mxu0 %v268
  %334 = vmatpush.msra.mxu0 %v261
  %335 = vmatpush.msra.mxu0 %v254
  %336 = vmatpush.msra.mxu0 %v247
  %337 = vmatpush.msra.mxu0 %v240
  %338 = vmatpush.msra.mxu0 %v233
  %339 = vmatpush.msra.mxu0 %v226
  %340 = vmatpush.msra.mxu0 %v219
  %341 = vmatpush.msra.mxu0 %v212
  %342 = vmatpush.msra.mxu0 %v205
  %343 = vmatpush.msra.mxu0 %v198
  %344 = vmatpush.msra.mxu0 %v191
  %345 = vmatpush.msra.mxu0 %v184
  %346 = vmatpush.msra.mxu0 %v177
  %347 = vmatmul.f32.gmra.mxu0 %v308
  %v348 = vpop.f32.mrf.mxu0
  %v349 = vadd.f32 %v329, %v348
  %350 = vdwg.mxu0
  %351 = vmatpush.msra.mxu0 %v171
  %352 = vmatpush.msra.mxu0 %v164
  %353 = vmatpush.msra.mxu0 %v157
  %354 = vmatpush.msra.mxu0 %v150
  %355 = vmatpush.msra.mxu0 %v143
  %356 = vmatpush.msra.mxu0 %v136
  %357 = vmatpush.msra.mxu0 %v129
  %358 = vmatpush.msra.mxu0 %v122
  %359 = vmatpush.msra.mxu0 %v115
  %360 = vmatpush.msra.mxu0 %v108
  %361 = vmatpush.msra.mxu0 %v101
  %362 = vmatpush.msra.mxu0 %v94
  %363 = vmatpush.msra.mxu0 %v87
  %364 = vmatpush.msra.mxu0 %v80
  %365 = vmatpush.msra.mxu0 %v73
  %366 = vmatpush.msra.mxu0 %v66
  %367 = vmatmul.f32.gmra.mxu0 %v307
  %v368 = vpop.f32.mrf.mxu0
  %v369 = vadd.f32 %v292, %v368
  %370 = vdwg.mxu0
  %371 = vmatpush.msra.mxu0 %v283
  %372 = vmatpush.msra.mxu0 %v276
  %373 = vmatpush.msra.mxu0 %v269
  %374 = vmatpush.msra.mxu0 %v262
  %375 = vmatpush.msra.mxu0 %v255
  %376 = vmatpush.msra.mxu0 %v248
  %377 = vmatpush.msra.mxu0 %v241
  %378 = vmatpush.msra.mxu0 %v234
  %379 = vmatpush.msra.mxu0 %v227
  %380 = vmatpush.msra.mxu0 %v220
  %381 = vmatpush.msra.mxu0 %v213
  %382 = vmatpush.msra.mxu0 %v206
  %383 = vmatpush.msra.mxu0 %v199
  %384 = vmatpush.msra.mxu0 %v192
  %385 = vmatpush.msra.mxu0 %v185
  %386 = vmatpush.msra.mxu0 %v178
  %387 = vmatmul.f32.gmra.mxu0 %v308
  %v388 = vpop.f32.mrf.mxu0
  %v389 = vadd.f32 %v369, %v388
  %390 = vdwg.mxu0
  %391 = vmatpush.msra.mxu0 %v172
  %392 = vmatpush.msra.mxu0 %v165
  %393 = vmatpush.msra.mxu0 %v158
  %394 = vmatpush.msra.mxu0 %v151
  %395 = vmatpush.msra.mxu0 %v144
  %396 = vmatpush.msra.mxu0 %v137
  %397 = vmatpush.msra.mxu0 %v130
  %398 = vmatpush.msra.mxu0 %v123
  %399 = vmatpush.msra.mxu0 %v116
  %400 = vmatpush.msra.mxu0 %v109
  %401 = vmatpush.msra.mxu0 %v102
  %402 = vmatpush.msra.mxu0 %v95
  %403 = vmatpush.msra.mxu0 %v88
  %404 = vmatpush.msra.mxu0 %v81
  %405 = vmatpush.msra.mxu0 %v74
  %406 = vmatpush.msra.mxu0 %v67
  %407 = vmatmul.f32.gmra.mxu0 %v307
  %v408 = vpop.f32.mrf.mxu0
  %v409 = vadd.f32 %v293, %v408
  %410 = vdwg.mxu0
  %411 = vmatpush.msra.mxu0 %v284
  %412 = vmatpush.msra.mxu0 %v277
  %413 = vmatpush.msra.mxu0 %v270
  %414 = vmatpush.msra.mxu0 %v263
  %415 = vmatpush.msra.mxu0 %v256
  %416 = vmatpush.msra.mxu0 %v249
  %417 = vmatpush.msra.mxu0 %v242
  %418 = vmatpush.msra.mxu0 %v235
  %419 = vmatpush.msra.mxu0 %v228
  %420 = vmatpush.msra.mxu0 %v221
  %421 = vmatpush.msra.mxu0 %v214
  %422 = vmatpush.msra.mxu0 %v207
  %423 = vmatpush.msra.mxu0 %v200
  %424 = vmatpush.msra.mxu0 %v193
  %425 = vmatpush.msra.mxu0 %v186
  %426 = vmatpush.msra.mxu0 %v179
  %427 = vmatmul.f32.gmra.mxu0 %v308
  %v428 = vpop.f32.mrf.mxu0
  %v429 = vadd.f32 %v409, %v428
  %430 = vdwg.mxu0
  %431 = vmatpush.msra.mxu0 %v173
  %432 = vmatpush.msra.mxu0 %v166
  %433 = vmatpush.msra.mxu0 %v159
  %434 = vmatpush.msra.mxu0 %v152
  %435 = vmatpush.msra.mxu0 %v145
  %436 = vmatpush.msra.mxu0 %v138
  %437 = vmatpush.msra.mxu0 %v131
  %438 = vmatpush.msra.mxu0 %v124
  %439 = vmatpush.msra.mxu0 %v117
  %440 = vmatpush.msra.mxu0 %v110
  %441 = vmatpush.msra.mxu0 %v103
  %442 = vmatpush.msra.mxu0 %v96
  %443 = vmatpush.msra.mxu0 %v89
  %444 = vmatpush.msra.mxu0 %v82
  %445 = vmatpush.msra.mxu0 %v75
  %446 = vmatpush.msra.mxu0 %v68
  %447 = vmatmul.f32.gmra.mxu0 %v307
  %v448 = vpop.f32.mrf.mxu0
  %v449 = vadd.f32 %v294, %v448
  %450 = vdwg.mxu0
  %451 = vmatpush.msra.mxu0 %v285
  %452 = vmatpush.msra.mxu0 %v278
  %453 = vmatpush.msra.mxu0 %v271
  %454 = vmatpush.msra.mxu0 %v264
  %455 = vmatpush.msra.mxu0 %v257
  %456 = vmatpush.msra.mxu0 %v250
  %457 = vmatpush.msra.mxu0 %v243
  %458 = vmatpush.msra.mxu0 %v236
  %459 = vmatpush.msra.mxu0 %v229
  %460 = vmatpush.msra.mxu0 %v222
  %461 = vmatpush.msra.mxu0 %v215
  %462 = vmatpush.msra.mxu0 %v208
  %463 = vmatpush.msra.mxu0 %v201
  %464 = vmatpush.msra.mxu0 %v194
  %465 = vmatpush.msra.mxu0 %v187
  %466 = vmatpush.msra.mxu0 %v180
  %467 = vmatmul.f32.gmra.mxu0 %v308
  %v468 = vpop.f32.mrf.mxu0
  %v469 = vadd.f32 %v449, %v468
  %470 = vdwg.mxu0
  %471 = vmatpush.msra.mxu0 %v174
  %472 = vmatpush.msra.mxu0 %v167
  %473 = vmatpush.msra.mxu0 %v160
  %474 = vmatpush.msra.mxu0 %v153
  %475 = vmatpush.msra.mxu0 %v146
  %476 = vmatpush.msra.mxu0 %v139
  %477 = vmatpush.msra.mxu0 %v132
  %478 = vmatpush.msra.mxu0 %v125
  %479 = vmatpush.msra.mxu0 %v118
  %480 = vmatpush.msra.mxu0 %v111
  %481 = vmatpush.msra.mxu0 %v104
  %482 = vmatpush.msra.mxu0 %v97
  %483 = vmatpush.msra.mxu0 %v90
  %484 = vmatpush.msra.mxu0 %v83
  %485 = vmatpush.msra.mxu0 %v76
  %486 = vmatpush.msra.mxu0 %v69
  %487 = vmatmul.f32.gmra.mxu0 %v307
  %v488 = vpop.f32.mrf.mxu0
  %v489 = vadd.f32 %v295, %v488
  %490 = vdwg.mxu0
  %491 = vmatpush.msra.mxu0 %v286
  %492 = vmatpush.msra.mxu0 %v279
  %493 = vmatpush.msra.mxu0 %v272
  %494 = vmatpush.msra.mxu0 %v265
  %495 = vmatpush.msra.mxu0 %v258
  %496 = vmatpush.msra.mxu0 %v251
  %497 = vmatpush.msra.mxu0 %v244
  %498 = vmatpush.msra.mxu0 %v237
  %499 = vmatpush.msra.mxu0 %v230
  %500 = vmatpush.msra.mxu0 %v223
  %501 = vmatpush.msra.mxu0 %v216
  %502 = vmatpush.msra.mxu0 %v209
  %503 = vmatpush.msra.mxu0 %v202
  %504 = vmatpush.msra.mxu0 %v195
  %505 = vmatpush.msra.mxu0 %v188
  %506 = vmatpush.msra.mxu0 %v181
  %507 = vmatmul.f32.gmra.mxu0 %v308
  %v508 = vpop.f32.mrf.mxu0
  %v509 = vadd.f32 %v489, %v508
  %510 = vdwg.mxu0
  %511 = vmatpush.msra.mxu0 %v175
  %512 = vmatpush.msra.mxu0 %v168
  %513 = vmatpush.msra.mxu0 %v161
  %514 = vmatpush.msra.mxu0 %v154
  %515 = vmatpush.msra.mxu0 %v147
  %516 = vmatpush.msra.mxu0 %v140
  %517 = vmatpush.msra.mxu0 %v133
  %518 = vmatpush.msra.mxu0 %v126
  %519 = vmatpush.msra.mxu0 %v119
  %520 = vmatpush.msra.mxu0 %v112
  %521 = vmatpush.msra.mxu0 %v105
  %522 = vmatpush.msra.mxu0 %v98
  %523 = vmatpush.msra.mxu0 %v91
  %524 = vmatpush.msra.mxu0 %v84
  %525 = vmatpush.msra.mxu0 %v77
  %526 = vmatpush.msra.mxu0 %v70
  %527 = vmatmul.f32.gmra.mxu0 %v307
  %v528 = vpop.f32.mrf.mxu0
  %v529 = vadd.f32 %v296, %v528
  %530 = vdwg.mxu0
  %531 = vmatpush.msra.mxu0 %v287
  %532 = vmatpush.msra.mxu0 %v280
  %533 = vmatpush.msra.mxu0 %v273
  %534 = vmatpush.msra.mxu0 %v266
  %535 = vmatpush.msra.mxu0 %v259
  %536 = vmatpush.msra.mxu0 %v252
  %537 = vmatpush.msra.mxu0 %v245
  %538 = vmatpush.msra.mxu0 %v238
  %539 = vmatpush.msra.mxu0 %v231
  %540 = vmatpush.msra.mxu0 %v224
  %541 = vmatpush.msra.mxu0 %v217
  %542 = vmatpush.msra.mxu0 %v210
  %543 = vmatpush.msra.mxu0 %v203
  %544 = vmatpush.msra.mxu0 %v196
  %545 = vmatpush.msra.mxu0 %v189
  %546 = vmatpush.msra.mxu0 %v182
  %547 = vmatmul.f32.gmra.mxu0 %v308
  %v548 = vpop.f32.mrf.mxu0
  %v549 = vadd.f32 %v529, %v548
  %550 = vdwg.mxu0
  %551 = vmatpush.msra.mxu0 %v176
  %552 = vmatpush.msra.mxu0 %v169
  %553 = vmatpush.msra.mxu0 %v162
  %554 = vmatpush.msra.mxu0 %v155
  %555 = vmatpush.msra.mxu0 %v148
  %556 = vmatpush.msra.mxu0 %v141
  %557 = vmatpush.msra.mxu0 %v134
  %558 = vmatpush.msra.mxu0 %v127
  %559 = vmatpush.msra.mxu0 %v120
  %560 = vmatpush.msra.mxu0 %v113
  %561 = vmatpush.msra.mxu0 %v106
  %562 = vmatpush.msra.mxu0 %v99
  %563 = vmatpush.msra.mxu0 %v92
  %564 = vmatpush.msra.mxu0 %v85
  %565 = vmatpush.msra.mxu0 %v78
  %566 = vmatpush.msra.mxu0 %v71
  %567 = vmatmul.f32.gmra.mxu0 %v307
  %v568 = vpop.f32.mrf.mxu0
  %v569 = vadd.f32 %v297, %v568
  %570 = vdwg.mxu0
  %571 = vmatpush.msra.mxu0 %v288
  %572 = vmatpush.msra.mxu0 %v281
  %573 = vmatpush.msra.mxu0 %v274
  %574 = vmatpush.msra.mxu0 %v267
  %575 = vmatpush.msra.mxu0 %v260
  %576 = vmatpush.msra.mxu0 %v253
  %577 = vmatpush.msra.mxu0 %v246
  %578 = vmatpush.msra.mxu0 %v239
  %579 = vmatpush.msra.mxu0 %v232
  %580 = vmatpush.msra.mxu0 %v225
  %581 = vmatpush.msra.mxu0 %v218
  %582 = vmatpush.msra.mxu0 %v211
  %583 = vmatpush.msra.mxu0 %v204
  %584 = vmatpush.msra.mxu0 %v197
  %585 = vmatpush.msra.mxu0 %v190
  %586 = vmatpush.msra.mxu0 %v183
  %587 = vmatmul.f32.gmra.mxu0 %v308
  %v588 = vpop.f32.mrf.mxu0
  %v589 = vadd.f32 %v569, %v588
  %590 = vdwg.mxu0
  %v591 = vmax.f32 %v349, 0.0
  %v592 = vmax.f32 %v389, 0.0
  %v593 = vmax.f32 %v429, 0.0
  %v594 = vmax.f32 %v469, 0.0
  %v595 = vmax.f32 %v509, 0.0
  %v596 = vmax.f32 %v549, 0.0
  %v597 = vmax.f32 %v589, 0.0
  %v598 = vld [vmem:[%s3] sm:$0xff]
  %v599 = vld [vmem:[%s3 + $0x8] sm:$0xff]
  %v600 = vld [vmem:[%s3 + $0x10] sm:$0xff]
  %v601 = vld [vmem:[%s3 + $0x18] sm:$0xff]
  %v602 = vld [vmem:[%s3 + $0x20] sm:$0xff]
  %v603 = vld [vmem:[%s3 + $0x28] sm:$0xff]
  %v604 = vld [vmem:[%s3 + $0x30] sm:$0xff]
  %v605 = vld [vmem:[%s3 + $0x38] sm:$0xff]
  %v606 = vld [vmem:[%s3 + $0x40] sm:$0xff]
  %v607 = vld [vmem:[%s3 + $0x48] sm:$0xff]
  %v608 = vld [vmem:[%s3 + $0x50] sm:$0xff]
  %v609 = vld [vmem:[%s3 + $0x58] sm:$0xff]
  %v610 = vld [vmem:[%s3 + $0x60] sm:$0xff]
  %v611 = vld [vmem:[%s3 + $0x68] sm:$0xff]
  %v612 = vld [vmem:[%s3 + $0x70] sm:$0xff]
  %v613 = vld [vmem:[%s3 + $0x78] sm:$0xff]
  %v614 = vld [vmem:[%s3 + $0x80] sm:$0xff]
  %v615 = vld [vmem:[%s3 + $0x88] sm:$0xff]
  %v616 = vld [vmem:[%s3 + $0x90] sm:$0xff]
  %v617 = vld [vmem:[%s3 + $0x98] sm:$0xff]
  %v618 = vld [vmem:[%s3 + $0xa0] sm:$0xff]
  %v619 = vld [vmem:[%s3 + $0xa8] sm:$0xff]
  %v620 = vld [vmem:[%s3 + $0xb0] sm:$0xff]
  %v621 = vld [vmem:[%s3 + $0xb8] sm:$0xff]
  %v622 = vld [vmem:[%s3 + $0xc0] sm:$0xff]
  %v623 = vld [vmem:[%s3 + $0xc8] sm:$0xff]
  %v624 = vld [vmem:[%s3 + $0xd0] sm:$0xff]
  %v625 = vld [vmem:[%s3 + $0xd8] sm:$0xff]
  %v626 = vld [vmem:[%s3 + $0xe0] sm:$0xff]
  %v627 = vld [vmem:[%s3 + $0xe8] sm:$0xff]
  %v628 = vld [vmem:[%s3 + $0xf0] sm:$0xff]
  %v629 = vld [vmem:[%s3 + $0xf8] sm:$0xff]
  %v630 = vld [vmem:[%s3 + $0x100] sm:$0xff]
  %v631 = vld [vmem:[%s3 + $0x108] sm:$0xff]
  %v632 = vld [vmem:[%s3 + $0x110] sm:$0xff]
  %v633 = vld [vmem:[%s3 + $0x118] sm:$0xff]
  %v634 = vld [vmem:[%s3 + $0x120] sm:$0xff]
  %v635 = vld [vmem:[%s3 + $0x128] sm:$0xff]
  %v636 = vld [vmem:[%s3 + $0x130] sm:$0xff]
  %v637 = vld [vmem:[%s3 + $0x138] sm:$0xff]
  %v638 = vld [vmem:[%s3 + $0x140] sm:$0xff]
  %v639 = vld [vmem:[%s3 + $0x148] sm:$0xff]
  %v640 = vld [vmem:[%s3 + $0x150] sm:$0xff]
  %v641 = vld [vmem:[%s3 + $0x158] sm:$0xff]
  %v642 = vld [vmem:[%s3 + $0x160] sm:$0xff]
  %v643 = vld [vmem:[%s3 + $0x168] sm:$0xff]
  %v644 = vld [vmem:[%s3 + $0x170] sm:$0xff]
  %v645 = vld [vmem:[%s3 + $0x178] sm:$0xff]
  %v646 = vld [vmem:[%s3 + $0x180] sm:$0xff]
  %v647 = vld [vmem:[%s3 + $0x188] sm:$0xff]
  %v648 = vld [vmem:[%s3 + $0x190] sm:$0xff]
  %v649 = vld [vmem:[%s3 + $0x198] sm:$0xff]
  %v650 = vld [vmem:[%s3 + $0x1a0] sm:$0xff]
  %v651 = vld [vmem:[%s3 + $0x1a8] sm:$0xff]
  %v652 = vld [vmem:[%s3 + $0x1b0] sm:$0xff]
  %v653 = vld [vmem:[%s3 + $0x1b8] sm:$0xff]
  %v654 = vld [vmem:[%s3 + $0x1c0] sm:$0xff]
  %v655 = vld [vmem:[%s3 + $0x1c8] sm:$0xff]
  %v656 = vld [vmem:[%s3 + $0x1d0] sm:$0xff]
  %v657 = vld [vmem:[%s3 + $0x1d8] sm:$0xff]
  %v658 = vld [vmem:[%s3 + $0x1e0] sm:$0xff]
  %v659 = vld [vmem:[%s3 + $0x1e8] sm:$0xff]
  %v660 = vld [vmem:[%s3 + $0x1f0] sm:$0xff]
  %v661 = vld [vmem:[%s3 + $0x1f8] sm:$0xff]
  %v662 = vld [vmem:[%s3 + $0x200] sm:$0xff]
  %v663 = vld [vmem:[%s3 + $0x208] sm:$0xff]
  %v664 = vld [vmem:[%s3 + $0x210] sm:$0xff]
  %v665 = vld [vmem:[%s3 + $0x218] sm:$0xff]
  %v666 = vld [vmem:[%s3 + $0x220] sm:$0xff]
  %v667 = vld [vmem:[%s3 + $0x228] sm:$0xff]
  %v668 = vld [vmem:[%s3 + $0x230] sm:$0xff]
  %v669 = vld [vmem:[%s3 + $0x238] sm:$0xff]
  %v670 = vld [vmem:[%s3 + $0x240] sm:$0xff]
  %v671 = vld [vmem:[%s3 + $0x248] sm:$0xff]
  %v672 = vld [vmem:[%s3 + $0x250] sm:$0xff]
  %v673 = vld [vmem:[%s3 + $0x258] sm:$0xff]
  %v674 = vld [vmem:[%s3 + $0x260] sm:$0xff]
  %v675 = vld [vmem:[%s3 + $0x268] sm:$0xff]
  %v676 = vld [vmem:[%s3 + $0x270] sm:$0xff]
  %v677 = vld [vmem:[%s3 + $0x278] sm:$0xff]
  %v678 = vld [vmem:[%s3 + $0x280] sm:$0xff]
  %v679 = vld [vmem:[%s3 + $0x288] sm:$0xff]
  %v680 = vld [vmem:[%s3 + $0x290] sm:$0xff]
  %v681 = vld [vmem:[%s3 + $0x298] sm:$0xff]
  %v682 = vld [vmem:[%s3 + $0x2a0] sm:$0xff]
  %v683 = vld [vmem:[%s3 + $0x2a8] sm:$0xff]
  %v684 = vld [vmem:[%s3 + $0x2b0] sm:$0xff]
  %v685 = vld [vmem:[%s3 + $0x2b8] sm:$0xff]
  %v686 = vld [vmem:[%s3 + $0x2c0] sm:$0xff]
  %v687 = vld [vmem:[%s3 + $0x2c8] sm:$0xff]
  %v688 = vld [vmem:[%s3 + $0x2d0] sm:$0xff]
  %v689 = vld [vmem:[%s3 + $0x2d8] sm:$0xff]
  %v690 = vld [vmem:[%s3 + $0x2e0] sm:$0xff]
  %v691 = vld [vmem:[%s3 + $0x2e8] sm:$0xff]
  %v692 = vld [vmem:[%s3 + $0x2f0] sm:$0xff]
  %v693 = vld [vmem:[%s3 + $0x2f8] sm:$0xff]
  %v694 = vld [vmem:[%s3 + $0x300] sm:$0xff]
  %v695 = vld [vmem:[%s3 + $0x308] sm:$0xff]
  %v696 = vld [vmem:[%s3 + $0x310] sm:$0xff]
  %v697 = vld [vmem:[%s3 + $0x318] sm:$0xff]
  %v698 = vld [vmem:[%s3 + $0x320] sm:$0xff]
  %v699 = vld [vmem:[%s3 + $0x328] sm:$0xff]
  %v700 = vld [vmem:[%s3 + $0x330] sm:$0xff]
  %v701 = vld [vmem:[%s3 + $0x338] sm:$0xff]
  %v702 = vld [vmem:[%s3 + $0x340] sm:$0xff]
  %v703 = vld [vmem:[%s3 + $0x348] sm:$0xff]
  %v704 = vld [vmem:[%s3 + $0x350] sm:$0xff]
  %v705 = vld [vmem:[%s3 + $0x358] sm:$0xff]
  %v706 = vld [vmem:[%s3 + $0x360] sm:$0xff]
  %v707 = vld [vmem:[%s3 + $0x368] sm:$0xff]
  %v708 = vld [vmem:[%s3 + $0x370] sm:$0xff]
  %v709 = vld [vmem:[%s3 + $0x378] sm:$0xff]
  %v710 = vld [vmem:[%s3 + $0x380] sm:$0xff]
  %v711 = vld [vmem:[%s3 + $0x388] sm:$0xff]
  %v712 = vld [vmem:[%s3 + $0x390] sm:$0xff]
  %v713 = vld [vmem:[%s3 + $0x398] sm:$0xff]
  %v714 = vld [vmem:[%s3 + $0x3a0] sm:$0xff]
  %v715 = vld [vmem:[%s3 + $0x3a8] sm:$0xff]
  %v716 = vld [vmem:[%s3 + $0x3b0] sm:$0xff]
  %v717 = vld [vmem:[%s3 + $0x3b8] sm:$0xff]
  %v718 = vld [vmem:[%s3 + $0x3c0] sm:$0xff]
  %v719 = vld [vmem:[%s3 + $0x3c8] sm:$0xff]
  %v720 = vld [vmem:[%s3 + $0x3d0] sm:$0xff]
  %v721 = vld [vmem:[%s3 + $0x3d8] sm:$0xff]
  %v722 = vld [vmem:[%s3 + $0x3e0] sm:$0xff]
  %v723 = vld [vmem:[%s3 + $0x3e8] sm:$0xff]
  %v724 = vld [vmem:[%s3 + $0x3f0] sm:$0xff]
  %v725 = vld [vmem:[%s3 + $0x3f8] sm:$0xff]
  %v726 = vld [vmem:[%s3 + $0x400] sm:$0xff]
  %v727 = vld [vmem:[%s3 + $0x408] sm:$0xff]
  %v728 = vld [vmem:[%s3 + $0x410] sm:$0xff]
  %v729 = vld [vmem:[%s3 + $0x418] sm:$0xff]
  %v730 = vld [vmem:[%s3 + $0x420] sm:$0xff]
  %v731 = vld [vmem:[%s3 + $0x428] sm:$0xff]
  %v732 = vld [vmem:[%s3 + $0x430] sm:$0xff]
  %v733 = vld [vmem:[%s3 + $0x438] sm:$0xff]
  %v734 = vld [vmem:[%s3 + $0x440] sm:$0xff]
  %v735 = vld [vmem:[%s3 + $0x448] sm:$0xff]
  %v736 = vld [vmem:[%s3 + $0x450] sm:$0xff]
  %v737 = vld [vmem:[%s3 + $0x458] sm:$0xff]
  %v738 = vld [vmem:[%s3 + $0x460] sm:$0xff]
  %v739 = vld [vmem:[%s3 + $0x468] sm:$0xff]
  %v740 = vld [vmem:[%s3 + $0x470] sm:$0xff]
  %v741 = vld [vmem:[%s3 + $0x478] sm:$0xff]
  %v742 = vld [vmem:[%s3 + $0x480] sm:$0xff]
  %v743 = vld [vmem:[%s3 + $0x488] sm:$0xff]
  %v744 = vld [vmem:[%s3 + $0x490] sm:$0xff]
  %v745 = vld [vmem:[%s3 + $0x498] sm:$0xff]
  %v746 = vld [vmem:[%s3 + $0x4a0] sm:$0xff]
  %v747 = vld [vmem:[%s3 + $0x4a8] sm:$0xff]
  %v748 = vld [vmem:[%s3 + $0x4b0] sm:$0xff]
  %v749 = vld [vmem:[%s3 + $0x4b8] sm:$0xff]
  %v750 = vld [vmem:[%s3 + $0x4c0] sm:$0xff]
  %v751 = vld [vmem:[%s3 + $0x4c8] sm:$0xff]
  %v752 = vld [vmem:[%s3 + $0x4d0] sm:$0xff]
  %v753 = vld [vmem:[%s3 + $0x4d8] sm:$0xff]
  %v754 = vld [vmem:[%s3 + $0x4e0] sm:$0xff]
  %v755 = vld [vmem:[%s3 + $0x4e8] sm:$0xff]
  %v756 = vld [vmem:[%s3 + $0x4f0] sm:$0xff]
  %v757 = vld [vmem:[%s3 + $0x4f8] sm:$0xff]
  %v758 = vld [vmem:[%s3 + $0x500] sm:$0xff]
  %v759 = vld [vmem:[%s3 + $0x508] sm:$0xff]
  %v760 = vld [vmem:[%s3 + $0x510] sm:$0xff]
  %v761 = vld [vmem:[%s3 + $0x518] sm:$0xff]
  %v762 = vld [vmem:[%s3 + $0x520] sm:$0xff]
  %v763 = vld [vmem:[%s3 + $0x528] sm:$0xff]
  %v764 = vld [vmem:[%s3 + $0x530] sm:$0xff]
  %v765 = vld [vmem:[%s3 + $0x538] sm:$0xff]
  %v766 = vld [vmem:[%s3 + $0x540] sm:$0xff]
  %v767 = vld [vmem:[%s3 + $0x548] sm:$0xff]
  %v768 = vld [vmem:[%s3 + $0x550] sm:$0xff]
  %v769 = vld [vmem:[%s3 + $0x558] sm:$0xff]
  %v770 = vld [vmem:[%s3 + $0x560] sm:$0xff]
  %v771 = vld [vmem:[%s3 + $0x568] sm:$0xff]
  %v772 = vld [vmem:[%s3 + $0x570] sm:$0xff]
  %v773 = vld [vmem:[%s3 + $0x578] sm:$0xff]
  %v774 = vld [vmem:[%s3 + $0x580] sm:$0xff]
  %v775 = vld [vmem:[%s3 + $0x588] sm:$0xff]
  %v776 = vld [vmem:[%s3 + $0x590] sm:$0xff]
  %v777 = vld [vmem:[%s3 + $0x598] sm:$0xff]
  %v778 = vld [vmem:[%s3 + $0x5a0] sm:$0xff]
  %v779 = vld [vmem:[%s3 + $0x5a8] sm:$0xff]
  %v780 = vld [vmem:[%s3 + $0x5b0] sm:$0xff]
  %v781 = vld [vmem:[%s3 + $0x5b8] sm:$0xff]
  %v782 = vld [vmem:[%s3 + $0x5c0] sm:$0xff]
  %v783 = vld [vmem:[%s3 + $0x5c8] sm:$0xff]
  %v784 = vld [vmem:[%s3 + $0x5d0] sm:$0xff]
  %v785 = vld [vmem:[%s3 + $0x5d8] sm:$0xff]
  %v786 = vld [vmem:[%s3 + $0x5e0] sm:$0xff]
  %v787 = vld [vmem:[%s3 + $0x5e8] sm:$0xff]
  %v788 = vld [vmem:[%s3 + $0x5f0] sm:$0xff]
  %v789 = vld [vmem:[%s3 + $0x5f8] sm:$0xff]
  %v790 = vld [vmem:[%s3 + $0x600] sm:$0xff]
  %v791 = vld [vmem:[%s3 + $0x608] sm:$0xff]
  %v792 = vld [vmem:[%s3 + $0x610] sm:$0xff]
  %v793 = vld [vmem:[%s3 + $0x618] sm:$0xff]
  %v794 = vld [vmem:[%s4] sm:$0x3]
  %v796 = vperm.slane %v794, 0
  %v797 = vperm.slane %v794, 1
  %vm800 = vcmask 130048
  %v802 = vsel %vm800, %v597, 0
  %804 = vmatpush.msra.mxu0 %v628
  %805 = vmatpush.msra.mxu0 %v626
  %806 = vmatpush.msra.mxu0 %v624
  %807 = vmatpush.msra.mxu0 %v622
  %808 = vmatpush.msra.mxu0 %v620
  %809 = vmatpush.msra.mxu0 %v618
  %810 = vmatpush.msra.mxu0 %v616
  %811 = vmatpush.msra.mxu0 %v614
  %812 = vmatpush.msra.mxu0 %v612
  %813 = vmatpush.msra.mxu0 %v610
  %814 = vmatpush.msra.mxu0 %v608
  %815 = vmatpush.msra.mxu0 %v606
  %816 = vmatpush.msra.mxu0 %v604
  %817 = vmatpush.msra.mxu0 %v602
  %818 = vmatpush.msra.mxu0 %v600
  %819 = vmatpush.msra.mxu0 %v598
  %820 = vmatmul.f32.gmra.mxu0 %v591
  %v821 = vpop.f32.mrf.mxu0
  %v822 = vadd.f32 %v796, %v821
  %823 = vdwg.mxu0
  %824 = vmatpush.msra.mxu0 %v660
  %825 = vmatpush.msra.mxu0 %v658
  %826 = vmatpush.msra.mxu0 %v656
  %827 = vmatpush.msra.mxu0 %v654
  %828 = vmatpush.msra.mxu0 %v652
  %829 = vmatpush.msra.mxu0 %v650
  %830 = vmatpush.msra.mxu0 %v648
  %831 = vmatpush.msra.mxu0 %v646
  %832 = vmatpush.msra.mxu0 %v644
  %833 = vmatpush.msra.mxu0 %v642
  %834 = vmatpush.msra.mxu0 %v640
  %835 = vmatpush.msra.mxu0 %v638
  %836 = vmatpush.msra.mxu0 %v636
  %837 = vmatpush.msra.mxu0 %v634
  %838 = vmatpush.msra.mxu0 %v632
  %839 = vmatpush.msra.mxu0 %v630
  %840 = vmatmul.f32.gmra.mxu0 %v592
  %v841 = vpop.f32.mrf.mxu0
  %v842 = vadd.f32 %v822, %v841
  %843 = vdwg.mxu0
  %844 = vmatpush.msra.mxu0 %v692
  %845 = vmatpush.msra.mxu0 %v690
  %846 = vmatpush.msra.mxu0 %v688
  %847 = vmatpush.msra.mxu0 %v686
  %848 = vmatpush.msra.mxu0 %v684
  %849 = vmatpush.msra.mxu0 %v682
  %850 = vmatpush.msra.mxu0 %v680
  %851 = vmatpush.msra.mxu0 %v678
  %852 = vmatpush.msra.mxu0 %v676
  %853 = vmatpush.msra.mxu0 %v674
  %854 = vmatpush.msra.mxu0 %v672
  %855 = vmatpush.msra.mxu0 %v670
  %856 = vmatpush.msra.mxu0 %v668
  %857 = vmatpush.msra.mxu0 %v666
  %858 = vmatpush.msra.mxu0 %v664
  %859 = vmatpush.msra.mxu0 %v662
  %860 = vmatmul.f32.gmra.mxu0 %v593
  %v861 = vpop.f32.mrf.mxu0
  %v862 = vadd.f32 %v842, %v861
  %863 = vdwg.mxu0
  %864 = vmatpush.msra.mxu0 %v724
  %865 = vmatpush.msra.mxu0 %v722
  %866 = vmatpush.msra.mxu0 %v720
  %867 = vmatpush.msra.mxu0 %v718
  %868 = vmatpush.msra.mxu0 %v716
  %869 = vmatpush.msra.mxu0 %v714
  %870 = vmatpush.msra.mxu0 %v712
  %871 = vmatpush.msra.mxu0 %v710
  %872 = vmatpush.msra.mxu0 %v708
  %873 = vmatpush.msra.mxu0 %v706
  %874 = vmatpush.msra.mxu0 %v704
  %875 = vmatpush.msra.mxu0 %v702
  %876 = vmatpush.msra.mxu0 %v700
  %877 = vmatpush.msra.mxu0 %v698
  %878 = vmatpush.msra.mxu0 %v696
  %879 = vmatpush.msra.mxu0 %v694
  %880 = vmatmul.f32.gmra.mxu0 %v594
  %v881 = vpop.f32.mrf.mxu0
  %v882 = vadd.f32 %v862, %v881
  %883 = vdwg.mxu0
  %884 = vmatpush.msra.mxu0 %v756
  %885 = vmatpush.msra.mxu0 %v754
  %886 = vmatpush.msra.mxu0 %v752
  %887 = vmatpush.msra.mxu0 %v750
  %888 = vmatpush.msra.mxu0 %v748
  %889 = vmatpush.msra.mxu0 %v746
  %890 = vmatpush.msra.mxu0 %v744
  %891 = vmatpush.msra.mxu0 %v742
  %892 = vmatpush.msra.mxu0 %v740
  %893 = vmatpush.msra.mxu0 %v738
  %894 = vmatpush.msra.mxu0 %v736
  %895 = vmatpush.msra.mxu0 %v734
  %896 = vmatpush.msra.mxu0 %v732
  %897 = vmatpush.msra.mxu0 %v730
  %898 = vmatpush.msra.mxu0 %v728
  %899 = vmatpush.msra.mxu0 %v726
  %900 = vmatmul.f32.gmra.mxu0 %v595
  %v901 = vpop.f32.mrf.mxu0
  %v902 = vadd.f32 %v882, %v901
  %903 = vdwg.mxu0
  %904 = vmatpush.msra.mxu0 %v788
  %905 = vmatpush.msra.mxu0 %v786
  %906 = vmatpush.msra.mxu0 %v784
  %907 = vmatpush.msra.mxu0 %v782
  %908 = vmatpush.msra.mxu0 %v780
  %909 = vmatpush.msra.mxu0 %v778
  %910 = vmatpush.msra.mxu0 %v776
  %911 = vmatpush.msra.mxu0 %v774
  %912 = vmatpush.msra.mxu0 %v772
  %913 = vmatpush.msra.mxu0 %v770
  %914 = vmatpush.msra.mxu0 %v768
  %915 = vmatpush.msra.mxu0 %v766
  %916 = vmatpush.msra.mxu0 %v764
  %917 = vmatpush.msra.mxu0 %v762
  %918 = vmatpush.msra.mxu0 %v760
  %919 = vmatpush.msra.mxu0 %v758
  %920 = vmatmul.f32.gmra.mxu0 %v596
  %v921 = vpop.f32.mrf.mxu0
  %v922 = vadd.f32 %v902, %v921
  %923 = vdwg.mxu0
  %924 = vmatpush.msra.mxu0 0.0
  %925 = vmatpush.msra.mxu0 0.0
  %926 = vmatpush.msra.mxu0 0.0
  %927 = vmatpush.msra.mxu0 0.0
  %928 = vmatpush.msra.mxu0 0.0
  %929 = vmatpush.msra.mxu0 0.0
  %930 = vmatpush.msra.mxu0 0.0
  %931 = vmatpush.msra.mxu0 0.0
  %932 = vmatpush.msra.mxu0 0.0
  %933 = vmatpush.msra.mxu0 0.0
  %934 = vmatpush.msra.mxu0 0.0
  %935 = vmatpush.msra.mxu0 0.0
  %936 = vmatpush.msra.mxu0 0.0
  %937 = vmatpush.msra.mxu0 0.0
  %938 = vmatpush.msra.mxu0 %v792
  %939 = vmatpush.msra.mxu0 %v790
  %940 = vmatmul.f32.gmra.mxu0 %v802
  %v941 = vpop.f32.mrf.mxu0
  %v942 = vadd.f32 %v922, %v941
  %943 = vdwg.mxu0
  %944 = vmatpush.msra.mxu0 %v629
  %945 = vmatpush.msra.mxu0 %v627
  %946 = vmatpush.msra.mxu0 %v625
  %947 = vmatpush.msra.mxu0 %v623
  %948 = vmatpush.msra.mxu0 %v621
  %949 = vmatpush.msra.mxu0 %v619
  %950 = vmatpush.msra.mxu0 %v617
  %951 = vmatpush.msra.mxu0 %v615
  %952 = vmatpush.msra.mxu0 %v613
  %953 = vmatpush.msra.mxu0 %v611
  %954 = vmatpush.msra.mxu0 %v609
  %955 = vmatpush.msra.mxu0 %v607
  %956 = vmatpush.msra.mxu0 %v605
  %957 = vmatpush.msra.mxu0 %v603
  %958 = vmatpush.msra.mxu0 %v601
  %959 = vmatpush.msra.mxu0 %v599
  %960 = vmatmul.f32.gmra.mxu0 %v591
  %v961 = vpop.f32.mrf.mxu0
  %v962 = vadd.f32 %v797, %v961
  %963 = vdwg.mxu0
  %964 = vmatpush.msra.mxu0 %v661
  %965 = vmatpush.msra.mxu0 %v659
  %966 = vmatpush.msra.mxu0 %v657
  %967 = vmatpush.msra.mxu0 %v655
  %968 = vmatpush.msra.mxu0 %v653
  %969 = vmatpush.msra.mxu0 %v651
  %970 = vmatpush.msra.mxu0 %v649
  %971 = vmatpush.msra.mxu0 %v647
  %972 = vmatpush.msra.mxu0 %v645
  %973 = vmatpush.msra.mxu0 %v643
  %974 = vmatpush.msra.mxu0 %v641
  %975 = vmatpush.msra.mxu0 %v639
  %976 = vmatpush.msra.mxu0 %v637
  %977 = vmatpush.msra.mxu0 %v635
  %978 = vmatpush.msra.mxu0 %v633
  %979 = vmatpush.msra.mxu0 %v631
  %980 = vmatmul.f32.gmra.mxu0 %v592
  %v981 = vpop.f32.mrf.mxu0
  %v982 = vadd.f32 %v962, %v981
  %983 = vdwg.mxu0
  %984 = vmatpush.msra.mxu0 %v693
  %985 = vmatpush.msra.mxu0 %v691
  %986 = vmatpush.msra.mxu0 %v689
  %987 = vmatpush.msra.mxu0 %v687
  %988 = vmatpush.msra.mxu0 %v685
  %989 = vmatpush.msra.mxu0 %v683
  %990 = vmatpush.msra.mxu0 %v681
  %991 = vmatpush.msra.mxu0 %v679
  %992 = vmatpush.msra.mxu0 %v677
  %993 = vmatpush.msra.mxu0 %v675
  %994 = vmatpush.msra.mxu0 %v673
  %995 = vmatpush.msra.mxu0 %v671
  %996 = vmatpush.msra.mxu0 %v669
  %997 = vmatpush.msra.mxu0 %v667
  %998 = vmatpush.msra.mxu0 %v665
  %999 = vmatpush.msra.mxu0 %v663
  %1000 = vmatmul.f32.gmra.mxu0 %v593
  %v1001 = vpop.f32.mrf.mxu0
  %v1002 = vadd.f32 %v982, %v1001
  %1003 = vdwg.mxu0
  %1004 = vmatpush.msra.mxu0 %v725
  %1005 = vmatpush.msra.mxu0 %v723
  %1006 = vmatpush.msra.mxu0 %v721
  %1007 = vmatpush.msra.mxu0 %v719
  %1008 = vmatpush.msra.mxu0 %v717
  %1009 = vmatpush.msra.mxu0 %v715
  %1010 = vmatpush.msra.mxu0 %v713
  %1011 = vmatpush.msra.mxu0 %v711
  %1012 = vmatpush.msra.mxu0 %v709
  %1013 = vmatpush.msra.mxu0 %v707
  %1014 = vmatpush.msra.mxu0 %v705
  %1015 = vmatpush.msra.mxu0 %v703
  %1016 = vmatpush.msra.mxu0 %v701
  %1017 = vmatpush.msra.mxu0 %v699
  %1018 = vmatpush.msra.mxu0 %v697
  %1019 = vmatpush.msra.mxu0 %v695
  %1020 = vmatmul.f32.gmra.mxu0 %v594
  %v1021 = vpop.f32.mrf.mxu0
  %v1022 = vadd.f32 %v1002, %v1021
  %1023 = vdwg.mxu0
  %1024 = vmatpush.msra.mxu0 %v757
  %1025 = vmatpush.msra.mxu0 %v755
  %1026 = vmatpush.msra.mxu0 %v753
  %1027 = vmatpush.msra.mxu0 %v751
  %1028 = vmatpush.msra.mxu0 %v749
  %1029 = vmatpush.msra.mxu0 %v747
  %1030 = vmatpush.msra.mxu0 %v745
  %1031 = vmatpush.msra.mxu0 %v743
  %1032 = vmatpush.msra.mxu0 %v741
  %1033 = vmatpush.msra.mxu0 %v739
  %1034 = vmatpush.msra.mxu0 %v737
  %1035 = vmatpush.msra.mxu0 %v735
  %1036 = vmatpush.msra.mxu0 %v733
  %1037 = vmatpush.msra.mxu0 %v731
  %1038 = vmatpush.msra.mxu0 %v729
  %1039 = vmatpush.msra.mxu0 %v727
  %1040 = vmatmul.f32.gmra.mxu0 %v595
  %v1041 = vpop.f32.mrf.mxu0
  %v1042 = vadd.f32 %v1022, %v1041
  %1043 = vdwg.mxu0
  %1044 = vmatpush.msra.mxu0 %v789
  %1045 = vmatpush.msra.mxu0 %v787
  %1046 = vmatpush.msra.mxu0 %v785
  %1047 = vmatpush.msra.mxu0 %v783
  %1048 = vmatpush.msra.mxu0 %v781
  %1049 = vmatpush.msra.mxu0 %v779
  %1050 = vmatpush.msra.mxu0 %v777
  %1051 = vmatpush.msra.mxu0 %v775
  %1052 = vmatpush.msra.mxu0 %v773
  %1053 = vmatpush.msra.mxu0 %v771
  %1054 = vmatpush.msra.mxu0 %v769
  %1055 = vmatpush.msra.mxu0 %v767
  %1056 = vmatpush.msra.mxu0 %v765
  %1057 = vmatpush.msra.mxu0 %v763
  %1058 = vmatpush.msra.mxu0 %v761
  %1059 = vmatpush.msra.mxu0 %v759
  %1060 = vmatmul.f32.gmra.mxu0 %v596
  %v1061 = vpop.f32.mrf.mxu0
  %v1062 = vadd.f32 %v1042, %v1061
  %1063 = vdwg.mxu0
  %1064 = vmatpush.msra.mxu0 0.0
  %1065 = vmatpush.msra.mxu0 0.0
  %1066 = vmatpush.msra.mxu0 0.0
  %1067 = vmatpush.msra.mxu0 0.0
  %1068 = vmatpush.msra.mxu0 0.0
  %1069 = vmatpush.msra.mxu0 0.0
  %1070 = vmatpush.msra.mxu0 0.0
  %1071 = vmatpush.msra.mxu0 0.0
  %1072 = vmatpush.msra.mxu0 0.0
  %1073 = vmatpush.msra.mxu0 0.0
  %1074 = vmatpush.msra.mxu0 0.0
  %1075 = vmatpush.msra.mxu0 0.0
  %1076 = vmatpush.msra.mxu0 0.0
  %1077 = vmatpush.msra.mxu0 0.0
  %1078 = vmatpush.msra.mxu0 %v793
  %1079 = vmatpush.msra.mxu0 %v791
  %1080 = vmatmul.f32.gmra.mxu0 %v802
  %v1081 = vpop.f32.mrf.mxu0
  %v1082 = vadd.f32 %v1062, %v1081
  %1083 = vdwg.mxu0
  %v1084 = vmax.f32 %v942, 0.0
  %v1085 = vmax.f32 %v1082, 0.0
  %v1086 = vld [vmem:[%s5] sm:$0xff]
  %v1087 = vld [vmem:[%s5 + $0x8] sm:$0xff]
  %v1088 = vld [vmem:[%s5 + $0x10] sm:$0xff]
  %v1089 = vld [vmem:[%s5 + $0x18] sm:$0xff]
  %v1090 = vld [vmem:[%s5 + $0x20] sm:$0xff]
  %v1091 = vld [vmem:[%s5 + $0x28] sm:$0xff]
  %v1092 = vld [vmem:[%s5 + $0x30] sm:$0xff]
  %v1093 = vld [vmem:[%s5 + $0x38] sm:$0xff]
  %v1094 = vld [vmem:[%s5 + $0x40] sm:$0xff]
  %v1095 = vld [vmem:[%s5 + $0x48] sm:$0xff]
  %v1096 = vld [vmem:[%s5 + $0x50] sm:$0xff]
  %v1097 = vld [vmem:[%s5 + $0x58] sm:$0xff]
  %v1098 = vld [vmem:[%s5 + $0x60] sm:$0xff]
  %v1099 = vld [vmem:[%s5 + $0x68] sm:$0xff]
  %v1100 = vld [vmem:[%s5 + $0x70] sm:$0xff]
  %v1101 = vld [vmem:[%s5 + $0x78] sm:$0xff]
  %v1102 = vld [vmem:[%s5 + $0x80] sm:$0xff]
  %v1103 = vld [vmem:[%s5 + $0x88] sm:$0xff]
  %v1104 = vld [vmem:[%s6] sm:$0x1]
  %v1106 = vperm.slane %v1104, 0
  %v1109 = vsel %vm800, %v1085, 0
  %1111 = vmatpush.msra.mxu0 %v1101
  %1112 = vmatpush.msra.mxu0 %v1100
  %1113 = vmatpush.msra.mxu0 %v1099
  %1114 = vmatpush.msra.mxu0 %v1098
  %1115 = vmatpush.msra.mxu0 %v1097
  %1116 = vmatpush.msra.mxu0 %v1096
  %1117 = vmatpush.msra.mxu0 %v1095
  %1118 = vmatpush.msra.mxu0 %v1094
  %1119 = vmatpush.msra.mxu0 %v1093
  %1120 = vmatpush.msra.mxu0 %v1092
  %1121 = vmatpush.msra.mxu0 %v1091
  %1122 = vmatpush.msra.mxu0 %v1090
  %1123 = vmatpush.msra.mxu0 %v1089
  %1124 = vmatpush.msra.mxu0 %v1088
  %1125 = vmatpush.msra.mxu0 %v1087
  %1126 = vmatpush.msra.mxu0 %v1086
  %1127 = vmatmul.f32.gmra.mxu0 %v1084
  %v1128 = vpop.f32.mrf.mxu0
  %v1129 = vadd.f32 %v1106, %v1128
  %1130 = vdwg.mxu0
  %1131 = vmatpush.msra.mxu0 0.0
  %1132 = vmatpush.msra.mxu0 0.0
  %1133 = vmatpush.msra.mxu0 0.0
  %1134 = vmatpush.msra.mxu0 0.0
  %1135 = vmatpush.msra.mxu0 0.0
  %1136 = vmatpush.msra.mxu0 0.0
  %1137 = vmatpush.msra.mxu0 0.0
  %1138 = vmatpush.msra.mxu0 0.0
  %1139 = vmatpush.msra.mxu0 0.0
  %1140 = vmatpush.msra.mxu0 0.0
  %1141 = vmatpush.msra.mxu0 0.0
  %1142 = vmatpush.msra.mxu0 0.0
  %1143 = vmatpush.msra.mxu0 0.0
  %1144 = vmatpush.msra.mxu0 0.0
  %1145 = vmatpush.msra.mxu0 %v1103
  %1146 = vmatpush.msra.mxu0 %v1102
  %1147 = vmatmul.f32.gmra.mxu0 %v1109
  %v1148 = vpop.f32.mrf.mxu0
  %v1149 = vadd.f32 %v1129, %v1148
  %1150 = vdwg.mxu0
  %v1151 = vmax.f32 %v1149, 0.0
  %v1152 = vld [vmem:[%s7] sm:$0xff]
  %v1153 = vld [vmem:[%s7 + $0x8] sm:$0xff]
  %v1154 = vld [vmem:[%s8] sm:$0x1]
  %v1156 = vperm.slane %v1154, 0
  %v1159 = vsel %vm800, %v1151, 0
  %1161 = vmatpush.msra.mxu0 0.0
  %1162 = vmatpush.msra.mxu0 0.0
  %1163 = vmatpush.msra.mxu0 0.0
  %1164 = vmatpush.msra.mxu0 0.0
  %1165 = vmatpush.msra.mxu0 0.0
  %1166 = vmatpush.msra.mxu0 0.0
  %1167 = vmatpush.msra.mxu0 0.0
  %1168 = vmatpush.msra.mxu0 0.0
  %1169 = vmatpush.msra.mxu0 0.0
  %1170 = vmatpush.msra.mxu0 0.0
  %1171 = vmatpush.msra.mxu0 0.0
  %1172 = vmatpush.msra.mxu0 0.0
  %1173 = vmatpush.msra.mxu0 0.0
  %1174 = vmatpush.msra.mxu0 0.0
  %1175 = vmatpush.msra.mxu0 %v1153
  %1176 = vmatpush.msra.mxu0 %v1152
  %1177 = vmatmul.f32.gmra.mxu0 %v1159
  %v1178 = vpop.f32.mrf.mxu0
  %v1179 = vadd.f32 %v1156, %v1178
  %1180 = vdwg.mxu0
  %v1181 = vmax.f32 %v1179, 0.0
  %v1182 = vld [vmem:[%s9] sm:$0xff]
  %v1183 = vld [vmem:[%s9 + $0x8] sm:$0xff]
  %v1184 = vld [vmem:[%s9 + $0x10] sm:$0xff]
  %v1185 = vld [vmem:[%s9 + $0x18] sm:$0xff]
  %v1186 = vld [vmem:[%s9 + $0x20] sm:$0xff]
  %v1187 = vld [vmem:[%s9 + $0x28] sm:$0xff]
  %v1188 = vld [vmem:[%s9 + $0x30] sm:$0xff]
  %v1189 = vld [vmem:[%s9 + $0x38] sm:$0xff]
  %v1190 = vld [vmem:[%s10] sm:$0x1]
  %v1192 = vperm.slane %v1190, 0
  %vm1194 = vcmask 523264
  %v1196 = vsel %vm1194, %v1181, 0
  %1198 = vmatpush.msra.mxu0 0.0
  %1199 = vmatpush.msra.mxu0 0.0
  %1200 = vmatpush.msra.mxu0 0.0
  %1201 = vmatpush.msra.mxu0 0.0
  %1202 = vmatpush.msra.mxu0 0.0
  %1203 = vmatpush.msra.mxu0 0.0
  %1204 = vmatpush.msra.mxu0 0.0
  %1205 = vmatpush.msra.mxu0 0.0
  %1206 = vmatpush.msra.mxu0 %v1189
  %1207 = vmatpush.msra.mxu0 %v1188
  %1208 = vmatpush.msra.mxu0 %v1187
  %1209 = vmatpush.msra.mxu0 %v1186
  %1210 = vmatpush.msra.mxu0 %v1185
  %1211 = vmatpush.msra.mxu0 %v1184
  %1212 = vmatpush.msra.mxu0 %v1183
  %1213 = vmatpush.msra.mxu0 %v1182
  %1214 = vmatmul.f32.gmra.mxu0 %v1196
  %v1215 = vpop.f32.mrf.mxu0
  %v1216 = vadd.f32 %v1192, %v1215
  %1217 = vdwg.mxu0
  %v1218 = vld [vmem:[%s11] sm:$0xff]
  %v1219 = vld [vmem:[%s11 + $0x8] sm:$0xff]
  %v1220 = vld [vmem:[%s12] sm:$0x1]
  %v1222 = vperm.slane %v1220, 0
  %1224 = vmatpush.msra.mxu0 0.0
  %1225 = vmatpush.msra.mxu0 0.0
  %1226 = vmatpush.msra.mxu0 0.0
  %1227 = vmatpush.msra.mxu0 0.0
  %1228 = vmatpush.msra.mxu0 0.0
  %1229 = vmatpush.msra.mxu0 0.0
  %1230 = vmatpush.msra.mxu0 0.0
  %1231 = vmatpush.msra.mxu0 0.0
  %1232 = vmatpush.msra.mxu0 0.0
  %1233 = vmatpush.msra.mxu0 0.0
  %1234 = vmatpush.msra.mxu0 0.0
  %1235 = vmatpush.msra.mxu0 0.0
  %1236 = vmatpush.msra.mxu0 0.0
  %1237 = vmatpush.msra.mxu0 0.0
  %1238 = vmatpush.msra.mxu0 %v1219
  %1239 = vmatpush.msra.mxu0 %v1218
  %1240 = vmatmul.f32.gmra.mxu0 %v1159
  %v1241 = vpop.f32.mrf.mxu0
  %v1242 = vadd.f32 %v1222, %v1241
  %1243 = vdwg.mxu0
  %v1244 = vmax.f32 %v1242, 0.0
  %v1245 = vld [vmem:[%s13] sm:$0xff]
  %v1246 = vld [vmem:[%s13 + $0x8] sm:$0xff]
  %v1247 = vld [vmem:[%s13 + $0x10] sm:$0xff]
  %v1248 = vld [vmem:[%s13 + $0x18] sm:$0xff]
  %v1249 = vld [vmem:[%s13 + $0x20] sm:$0xff]
  %v1250 = vld [vmem:[%s13 + $0x28] sm:$0xff]
  %v1251 = vld [vmem:[%s13 + $0x30] sm:$0xff]
  %v1252 = vld [vmem:[%s13 + $0x38] sm:$0xff]
  %v1253 = vld [vmem:[#allocation2] sm:$0x1]
  %v1255 = vperm.slane %v1253, 0
  %v1258 = vsel %vm1194, %v1244, 0
  %1260 = vmatpush.msra.mxu0 0.0
  %1261 = vmatpush.msra.mxu0 0.0
  %1262 = vmatpush.msra.mxu0 0.0
  %1263 = vmatpush.msra.mxu0 0.0
  %1264 = vmatpush.msra.mxu0 0.0
  %1265 = vmatpush.msra.mxu0 0.0
  %1266 = vmatpush.msra.mxu0 0.0
  %1267 = vmatpush.msra.mxu0 0.0
  %1268 = vmatpush.msra.mxu0 %v1252
  %1269 = vmatpush.msra.mxu0 %v1251
  %1270 = vmatpush.msra.mxu0 %v1250
  %1271 = vmatpush.msra.mxu0 %v1249
  %1272 = vmatpush.msra.mxu0 %v1248
  %1273 = vmatpush.msra.mxu0 %v1247
  %1274 = vmatpush.msra.mxu0 %v1246
  %1275 = vmatpush.msra.mxu0 %v1245
  %1276 = vmatmul.f32.gmra.mxu0 %v1258
  %v1277 = vpop.f32.mrf.mxu0
  %v1278 = vadd.f32 %v1255, %v1277
  %1279 = vdwg.mxu0
  %v1280 = vld [vmem:[%s15] sm:$0xff]
  %v1281 = vld [vmem:[%s15 + $0x8] sm:$0xff]
  %v1282 = vld [vmem:[%s15 + $0x10] sm:$0xff]
  %v1283 = vld [vmem:[%s15 + $0x18] sm:$0xff]
  %v1284 = vld [vmem:[%s15 + $0x20] sm:$0xff]
  %v1285 = vld [vmem:[%s15 + $0x28] sm:$0xff]
  %v1286 = vld [vmem:[%s15 + $0x30] sm:$0xff]
  %v1287 = vld [vmem:[%s15 + $0x38] sm:$0xff]
  %v1288 = vld [vmem:[%s16] sm:$0x1]
  %v1290 = vperm.slane %v1288, 0
  %v1293 = vsel %vm1194, %v1216, 0
  %1295 = vmatpush.msra.mxu0 0.0
  %1296 = vmatpush.msra.mxu0 0.0
  %1297 = vmatpush.msra.mxu0 0.0
  %1298 = vmatpush.msra.mxu0 0.0
  %1299 = vmatpush.msra.mxu0 0.0
  %1300 = vmatpush.msra.mxu0 0.0
  %1301 = vmatpush.msra.mxu0 0.0
  %1302 = vmatpush.msra.mxu0 0.0
  %1303 = vmatpush.msra.mxu0 %v1287
  %1304 = vmatpush.msra.mxu0 %v1286
  %1305 = vmatpush.msra.mxu0 %v1285
  %1306 = vmatpush.msra.mxu0 %v1284
  %1307 = vmatpush.msra.mxu0 %v1283
  %1308 = vmatpush.msra.mxu0 %v1282
  %1309 = vmatpush.msra.mxu0 %v1281
  %1310 = vmatpush.msra.mxu0 %v1280
  %1311 = vmatmul.f32.gmra.mxu0 %v1293
  %v1312 = vpop.f32.mrf.mxu0
  %v1313 = vadd.f32 %v1290, %v1312
  %1314 = vdwg.mxu0
  %v1315 = vld [vmem:[%s17] sm:$0x1]
  %v1316 = vld [vmem:[%s18] sm:$0x3]
  %v1317 = vmul.f32 %v1315, 1.442695
  %v1318 = vpow.pop %v1317
  %v1320 = vperm.slane %v1318, 0
  %v1322 = vmul.f32 %v1316, %v1320
  %v1323 = vadd.f32 %v1313, %v1322
  %v1324 = vmul.f32 %v1316, -0.5
  %v1325 = vmul.f32 %v1324, %v1316
  %v1327 = vperm.slane %v1315, 0
  %v1329 = vsub.f32 %v1325, %v1327
  %vm1330 = vcmask 9216
  %v1331 = vsel %vm1330, %v1329, 0.0
  %1332 = vadd.xlane.f32.xlu0 %v1331
  %v1333 = vpop.xlane.xlu0 %1332
  %v1334 = vsub.f32 %v1333, 1.837877
  %1335 = vst [vmem:[%s19] sm:$0x3] 0.0
  %1336 = vst.msk [vmem:[%s19] sm:$0x3] %vm1330, %v1323
  %1338 = vrot.lane.b32.xlu0 %v1278, 2
  %v1339 = vpop.permute.xlu0 %1338
  %vm1341 = vcmask 17424
  %1342 = vst.msk [vmem:[%s19] sm:$0x3] %vm1341, %v1339
  %vm1343 = vcmask 25624
  %1344 = vst.msk [vmem:[%s19] sm:$0x3] %vm1343, %v1334
  // Predicated region
  $region78: #{actor_critic_forward.1} parent=0 // pred_check
    _
  $region79: #{actor_critic_forward.1} parent=0 // pred_check_branch
    %1346 = sbr.rel (0) target = $region81
  $region80: #{actor_critic_forward.1} parent=0 // pred_region
    _
  $region81: #{actor_critic_forward.1} parent=0 // pred_fallthru
    _
  // Predicated region
  $region82: #{actor_critic_forward.1} parent=0 // pred_check
    _
  $region83: #{actor_critic_forward.1} parent=0 // pred_check_branch
    %1348 = sbr.rel (0) target = $region85
  $region84: #{actor_critic_forward.1} parent=0 // pred_region
    _
  $region85: #{actor_critic_forward.1} parent=0 // pred_fallthru
    _

</llo_original>
